<compile_context>
chip_gen: v7x
topology: tpu7x:2x2x1
jax: 0.10.0
libtpu: 0.0.40
codegen_flags: <defaults>
</compile_context>

<pallas_src>
import functools

import jax
import jax.numpy as jnp
from jax.experimental import pallas as pl
from jax.experimental.pallas import tpu as pltpu

LANE = 128


# ---------------------------------------------------------------------------
# Fused forward kernel: (token_embedding ∘ depth x TransformerBlock ∘ toprobs)
# ---------------------------------------------------------------------------
def _fused_kernel(x_ref, h_ref, wobs0_ref, bobs0_ref, wqkv_ref, wu_ref, bu_ref,
                  g1_ref, be1_ref, w1_ref, b1_ref, w2_ref, b2_ref,
                  g2_ref, be2_ref, bd_ref, topw_ref, topb_ref,
                  probs_ref, tok_ref, *, depth, emb, batch, eps):
    B, E, P = batch, emb, LANE
    inv_e = 1.0 / E

    hid = h_ref[...]                                           # (B, E)
    bd = bd_ref[...]                                           # (P, P) block-diag head sums

    # Depth-0 QKV with the token embedding folded in:
    #   obs rows : x @ [tokw @ wqkv0 | tokw_pad] (+bias) -> depth-0 QKV AND `tokens`
    #   hid rows : h @ wqkv0                              -> independent dot (overlaps)
    obs = jnp.dot(x_ref[...], wobs0_ref[...],
                  preferred_element_type=jnp.float32) + bobs0_ref[...]      # (B, 4P)
    qkv_h = jnp.dot(hid, wqkv_ref[0], preferred_element_type=jnp.float32)   # (B, 3P)

    tok_pad = obs[:, 3 * P:4 * P]                              # (B, P), lane-dense
    tok_ref[...] = tok_pad                                     # `tokens` output (obs part)

    # Residual slab, token-major rows: [0:B] obs-embedding token, [B:2B] hidden token.
    x = jnp.concatenate([tok_pad[:, :E], hid], axis=0)         # (2B, E)

    def layer_norm(y, g, b):
        # var = E[y^2] - mu^2  -> the two XLU reductions are independent.
        s1 = jnp.sum(y, axis=-1, keepdims=True)
        s2 = jnp.sum(y * y, axis=-1, keepdims=True)
        mu = s1 * inv_e
        var = s2 * inv_e - mu * mu
        return (y - mu) * jax.lax.rsqrt(var + eps) * g + b

    def attention(q0, k0, v0, q1, k1, v1, d):
        # Exact 2-key softmax: weight on key 1 = sigmoid(s.1 - s.0).
        # Per-head reductions via elementwise products + one block-diagonal matmul
        # (no per-head lane slices / lane concats / XLU reductions).
        kd = k1 - k0                                           # (B, P)
        vd = v1 - v0                                           # (B, P)
        prods = jnp.concatenate([q0 * kd, q1 * kd], axis=0)    # (2B, P)
        diff = jnp.dot(prods, bd, preferred_element_type=jnp.float32)   # per-head s.1 - s.0
        w1_key = 0.5 * jnp.tanh(0.5 * diff) + 0.5              # sigmoid (single EUP op)
        att_in = (jnp.concatenate([v0, v0], axis=0)
                  + w1_key * jnp.concatenate([vd, vd], axis=0))          # (2B, P), head-major
        return jnp.dot(att_in, wu_ref[d],
                       preferred_element_type=jnp.float32) + bu_ref[d]   # (2B, E)

    for d in range(depth):                                     # static unroll (depth small)
        if d == 0:
            q0, k0, v0 = obs[:, 0:P], obs[:, P:2 * P], obs[:, 2 * P:3 * P]
            q1, k1, v1 = qkv_h[:, 0:P], qkv_h[:, P:2 * P], qkv_h[:, 2 * P:3 * P]
        else:
            qkv = jnp.dot(x, wqkv_ref[d], preferred_element_type=jnp.float32)  # (2B, 3P)
            q0, k0, v0 = qkv[:B, 0:P], qkv[:B, P:2 * P], qkv[:B, 2 * P:3 * P]
            q1, k1, v1 = qkv[B:, 0:P], qkv[B:, P:2 * P], qkv[B:, 2 * P:3 * P]

        att = attention(q0, k0, v0, q1, k1, v1, d)
        y = layer_norm(att + x, g1_ref[d], be1_ref[d])
        hdn = jnp.maximum(
            jnp.dot(y, w1_ref[d], preferred_element_type=jnp.float32) + b1_ref[d], 0.0)
        ff = jnp.dot(hdn, w2_ref[d], preferred_element_type=jnp.float32) + b2_ref[d]
        x = layer_norm(ff + y, g2_ref[d], be2_ref[d])

    # toprobs; lane-padded (128-wide) output => unmasked full-width stores.
    probs_ref[...] = jnp.dot(x, topw_ref[...],
                             preferred_element_type=jnp.float32) + topb_ref[...]


# ---------------------------------------------------------------------------
# One-time weight packing (hoisted out of the per-call path).
# ---------------------------------------------------------------------------
def pack_params(params, heads):
    blocks = params['blocks']
    E = params['tok_w'].shape[1]
    HE = heads * E
    P = LANE
    assert HE <= P and E <= P and params['top_w'].shape[1] <= P
    scale = jnp.float32(E) ** -0.5           # full q·k scale folded into Q weights

    def pad_cols(a, width):
        return jnp.pad(a, ((0, 0), (0, width - a.shape[-1])))

    def qkv_pack(bw):
        # (E, 3P): [Q*scale | K | V], each segment padded to a 128-lane tile so
        # the in-kernel slices are lane-tile aligned.
        return jnp.concatenate([pad_cols(bw['wq'] * scale, P),
                                pad_cols(bw['wk'], P),
                                pad_cols(bw['wv'], P)], axis=1)

    wqkv = jnp.stack([qkv_pack(bw) for bw in blocks])          # (D, E, 3P)

    # Depth-0 obs rows: token embedding folded into the QKV projection, plus the
    # (lane-padded) `tokens` columns appended to the same matmul.
    tokw, tokb = params['tok_w'], params['tok_b']
    wobs0 = jnp.concatenate([tokw @ wqkv[0], pad_cols(tokw, P)], axis=1)   # (Td, 4P)
    bobs0 = jnp.concatenate([tokb @ wqkv[0], pad_cols(tokb, P)], axis=1)   # (1, 4P)

    stk = lambda name: jnp.stack([bw[name] for bw in blocks])
    wu = jnp.stack([jnp.pad(bw['wu'], ((0, P - HE), (0, 0))) for bw in blocks])  # (D, P, E)

    # Block-diagonal per-head summation matrix (128x128).
    ii = jnp.arange(P)[:, None]
    jj = jnp.arange(P)[None, :]
    bd = (((ii // E) == (jj // E)) & (ii < HE) & (jj < HE)).astype(jnp.float32)

    packed = dict(
        wobs0=wobs0, bobs0=bobs0, wqkv=wqkv,
        wu=wu, bu=stk('bu'),
        g1=stk('g1'), be1=stk('be1'), g2=stk('g2'), be2=stk('be2'),
        w1=stk('w1'), b1=stk('b1'), w2=stk('w2'), b2=stk('b2'),
        bd=bd,
        topw=pad_cols(params['top_w'], P), topb=pad_cols(params['top_b'], P),
    )
    return jax.tree_util.tree_map(lambda a: a.astype(jnp.float32), packed)


# ---------------------------------------------------------------------------
# Forward wrapper: Transformer.forward(x, h, mask=None, decoupling=False)
# returns (toprobs_output, tokens) just like the PyTorch module.
# ---------------------------------------------------------------------------
@functools.partial(jax.jit, static_argnames=("out_dim",))
def transformer_forward(packed, x, h, *, out_dim):
    xb, xt, token_dim = x.shape
    B = xb * xt
    E = h.shape[-1]
    depth = packed['wqkv'].shape[0]

    x2 = x.reshape(B, token_dim).astype(jnp.float32)   # x.view(b*t, 1, -1) squeezed
    h2 = h.reshape(B, E).astype(jnp.float32)           # h.view(b*t, 1, -1) squeezed

    args = (x2, h2, packed['wobs0'], packed['bobs0'], packed['wqkv'],
            packed['wu'], packed['bu'], packed['g1'], packed['be1'],
            packed['w1'], packed['b1'], packed['w2'], packed['b2'],
            packed['g2'], packed['be2'], packed['bd'],
            packed['topw'], packed['topb'])

    kern = functools.partial(_fused_kernel, depth=depth, emb=E, batch=B, eps=1e-5)

    # No grid: single invocation, whole (tiny) arrays resident in VMEM, no
    # pipeline prologue / double buffering.
    # TODO(synk): on v7x with much larger b*t, split rows across the two
    # TensorCores with a grid=(2,) "parallel" row dimension.
    vmem = pl.BlockSpec(memory_space=pltpu.MemorySpace.VMEM)
    probs_pad, tok_pad = pl.pallas_call(
        kern,
        out_shape=(jax.ShapeDtypeStruct((2 * B, LANE), jnp.float32),
                   jax.ShapeDtypeStruct((B, LANE), jnp.float32)),
        in_specs=[vmem] * len(args),
        out_specs=(vmem, vmem),
    )(*args)

    # un-pad / re-layout in plain JAX (cheap XLA slices)
    out = jnp.stack([probs_pad[:B, :out_dim], probs_pad[B:, :out_dim]], axis=1)
    tokens = jnp.stack([tok_pad[:, :E], h2], axis=1)
    return out, tokens


# ---------------------------------------------------------------------------
# Pure-JAX reference (mirrors the PyTorch module) for a numerical sanity check
# ---------------------------------------------------------------------------
def ref_forward(params, x, h, heads, depth, eps=1e-5):
    xb, xt, token_dim = x.shape
    B = xb * xt
    E = h.shape[-1]
    x2 = x.reshape(B, token_dim)
    h2 = h.reshape(B, E)
    tok = x2 @ params['tok_w'] + params['tok_b']
    tokens = jnp.stack([tok, h2], axis=1)              # (B, 2, E)
    xx = tokens
    scale = E ** (-0.25)

    def ln(y, g, b_):
        mu = jnp.mean(y, -1, keepdims=True)
        var = jnp.mean((y - mu) ** 2, -1, keepdims=True)
        return (y - mu) * jax.lax.rsqrt(var + eps) * g + b_

    for d in range(depth):
        bw = params['blocks'][d]
        q = (xx @ bw['wq']).reshape(B, 2, heads, E) * scale
        k = (xx @ bw['wk']).reshape(B, 2, heads, E) * scale
        v = (xx @ bw['wv']).reshape(B, 2, heads, E)
        s = jnp.einsum('bihe,bjhe->bhij', q, k)
        pmat = jax.nn.softmax(s, axis=-1)
        o = jnp.einsum('bhij,bjhe->bihe', pmat, v).reshape(B, 2, heads * E)
        att = o @ bw['wu'] + bw['bu']
        y = ln(att + xx, bw['g1'], bw['be1'])
        ff = jnp.maximum(y @ bw['w1'] + bw['b1'], 0.0) @ bw['w2'] + bw['b2']
        xx = ln(ff + y, bw['g2'], bw['be2'])

    out = (xx.reshape(B * 2, E) @ params['top_w'] + params['top_b']).reshape(B, 2, -1)
    return out, tokens


# ---------------------------------------------------------------------------
# Deterministic synthetic params (nn.Linear / nn.LayerNorm shapes, (in, out))
# ---------------------------------------------------------------------------
def init_params(key, token_dim, emb, heads, depth, output_dim):
    hid = 4 * emb
    keys = jax.random.split(key, 4 + depth * 9)
    it = iter(keys)

    def w(shape, scale=0.1):
        return jax.random.normal(next(it), shape, jnp.float32) * scale

    p = {
        'tok_w': w((token_dim, emb)), 'tok_b': w((1, emb)),
        'top_w': w((emb, output_dim)), 'top_b': w((1, output_dim)),
        'blocks': [],
    }
    for _ in range(depth):
        p['blocks'].append(dict(
            wq=w((emb, heads * emb)), wk=w((emb, heads * emb)), wv=w((emb, heads * emb)),
            wu=w((heads * emb, emb)), bu=w((1, emb)),
            g1=jnp.ones((1, emb), jnp.float32), be1=jnp.zeros((1, emb), jnp.float32),
            w1=w((emb, hid)), b1=w((1, hid)),
            w2=w((hid, emb)), b2=w((1, emb)),
            g2=jnp.ones((1, emb), jnp.float32), be2=jnp.zeros((1, emb), jnp.float32),
        ))
    return p


if __name__ == "__main__":
    # Transformer(input_dim=8, emb=32, heads=2, depth=2, output_dim=6), decoupling=False
    token_dim, emb, heads, depth, out_dim = 8, 32, 2, 2, 6
    batch, t = 2, 4

    key = jax.random.PRNGKey(0)
    kp, kx, kh = jax.random.split(key, 3)
    params = init_params(kp, token_dim, emb, heads, depth, out_dim)
    packed = pack_params(params, heads=heads)        # one-time weight packing (hoisted)

    x = jax.random.normal(kx, (batch, t, token_dim), jnp.float32)   # [batch, t, input_dim]
    h = jax.random.normal(kh, (batch, t, emb), jnp.float32)         # [batch, t, emb]

    out, tokens = transformer_forward(packed, x, h, out_dim=out_dim)
    out = jax.block_until_ready(out)
    tokens = jax.block_until_ready(tokens)

    out_exp, tok_exp = ref_forward(params, x, h, heads, depth)
    B = batch * t
    assert out.shape == (B, 2, out_dim), out.shape
    assert tokens.shape == (B, 2, emb), tokens.shape
    err_out = float(jnp.max(jnp.abs(out - out_exp)))
    err_tok = float(jnp.max(jnp.abs(tokens - tok_exp)))
    assert err_out < 2e-3, err_out      # exact sigmoid softmax -> tight tolerance
    assert err_tok < 1e-3, err_tok

    print("KERNEL_OK")
</pallas_src>

<mosaic_0001>
module attributes {stable_mosaic.version = 11 : i64} {
  func.func @_fused_kernel(%arg0: memref<8x8xf32, #tpu.memory_space<vmem>>, %arg1: memref<8x32xf32, #tpu.memory_space<vmem>>, %arg2: memref<8x512xf32, #tpu.memory_space<vmem>>, %arg3: memref<1x512xf32, #tpu.memory_space<vmem>>, %arg4: memref<2x32x384xf32, #tpu.memory_space<vmem>>, %arg5: memref<2x128x32xf32, #tpu.memory_space<vmem>>, %arg6: memref<2x1x32xf32, #tpu.memory_space<vmem>>, %arg7: memref<2x1x32xf32, #tpu.memory_space<vmem>>, %arg8: memref<2x1x32xf32, #tpu.memory_space<vmem>>, %arg9: memref<2x32x128xf32, #tpu.memory_space<vmem>>, %arg10: memref<2x1x128xf32, #tpu.memory_space<vmem>>, %arg11: memref<2x128x32xf32, #tpu.memory_space<vmem>>, %arg12: memref<2x1x32xf32, #tpu.memory_space<vmem>>, %arg13: memref<2x1x32xf32, #tpu.memory_space<vmem>>, %arg14: memref<2x1x32xf32, #tpu.memory_space<vmem>>, %arg15: memref<128x128xf32, #tpu.memory_space<vmem>>, %arg16: memref<32x128xf32, #tpu.memory_space<vmem>>, %arg17: memref<1x128xf32, #tpu.memory_space<vmem>>, %arg18: memref<16x128xf32, #tpu.memory_space<vmem>>, %arg19: memref<8x128xf32, #tpu.memory_space<vmem>>) attributes {dimension_semantics = [], scalar_prefetch = 0 : i64, scratch_operands = 0 : i64, tpu.core_type = #tpu.core_type<tc>} {
    %c0 = arith.constant 0 : index
    %c0_0 = arith.constant 0 : index
    %0 = vector.load %arg1[%c0, %c0_0] : memref<8x32xf32, #tpu.memory_space<vmem>>, vector<8x32xf32>
    %c0_1 = arith.constant 0 : index
    %c0_2 = arith.constant 0 : index
    %1 = vector.load %arg15[%c0_1, %c0_2] : memref<128x128xf32, #tpu.memory_space<vmem>>, vector<128x128xf32>
    %c0_3 = arith.constant 0 : index
    %c0_4 = arith.constant 0 : index
    %2 = vector.load %arg0[%c0_3, %c0_4] : memref<8x8xf32, #tpu.memory_space<vmem>>, vector<8x8xf32>
    %c0_5 = arith.constant 0 : index
    %c0_6 = arith.constant 0 : index
    %3 = vector.load %arg2[%c0_5, %c0_6] : memref<8x512xf32, #tpu.memory_space<vmem>>, vector<8x512xf32>
    %cst = arith.constant dense<0.000000e+00> : vector<8x512xf32>
    %4 = tpu.matmul %2, %3, %cst {dimension_numbers = #tpu.dot_dimension_numbers<[1], [0], [0], [1], [0, 0, 1, 1], [], []>} : vector<8x8xf32>, vector<8x512xf32>, vector<8x512xf32> -> vector<8x512xf32>
    %c0_7 = arith.constant 0 : index
    %c0_8 = arith.constant 0 : index
    %5 = vector.load %arg3[%c0_7, %c0_8] : memref<1x512xf32, #tpu.memory_space<vmem>>, vector<1x512xf32>
    %6 = vector.broadcast %5 : vector<1x512xf32> to vector<8x512xf32>
    %7 = arith.addf %4, %6 : vector<8x512xf32>
    %c0_9 = arith.constant 0 : index
    %c0_10 = arith.constant 0 : index
    %c0_11 = arith.constant 0 : index
    %8 = vector.load %arg4[%c0_9, %c0_10, %c0_11] : memref<2x32x384xf32, #tpu.memory_space<vmem>>, vector<1x32x384xf32>
    %9 = vector.shape_cast %8 : vector<1x32x384xf32> to vector<32x384xf32>
    %cst_12 = arith.constant dense<0.000000e+00> : vector<8x384xf32>
    %10 = tpu.matmul %0, %9, %cst_12 {dimension_numbers = #tpu.dot_dimension_numbers<[1], [0], [0], [1], [0, 0, 1, 1], [], []>} : vector<8x32xf32>, vector<32x384xf32>, vector<8x384xf32> -> vector<8x384xf32>
    %11 = vector.extract_strided_slice %7 {offsets = [0, 384], sizes = [8, 128], strides = [1, 1]} : vector<8x512xf32> to vector<8x128xf32>
    %c0_13 = arith.constant 0 : index
    %c0_14 = arith.constant 0 : index
    %12 = vector.load %arg19[%c0_13, %c0_14] : memref<8x128xf32, #tpu.memory_space<vmem>>, vector<8x128xf32>
    tpu.vector_store %arg19[%c0_13, %c0_14], %11 {strides = array<i32>} : memref<8x128xf32, #tpu.memory_space<vmem>>, vector<8x128xf32>,
    %13 = vector.extract_strided_slice %11 {offsets = [0, 0], sizes = [8, 32], strides = [1, 1]} : vector<8x128xf32> to vector<8x32xf32>
    %14 = tpu.concatenate %13, %0 in 0 : vector<8x32xf32>, vector<8x32xf32> -> vector<16x32xf32>
    %15 = vector.extract_strided_slice %7 {offsets = [0, 0], sizes = [8, 128], strides = [1, 1]} : vector<8x512xf32> to vector<8x128xf32>
    %16 = vector.extract_strided_slice %7 {offsets = [0, 128], sizes = [8, 128], strides = [1, 1]} : vector<8x512xf32> to vector<8x128xf32>
    %17 = vector.extract_strided_slice %7 {offsets = [0, 256], sizes = [8, 128], strides = [1, 1]} : vector<8x512xf32> to vector<8x128xf32>
    %18 = vector.extract_strided_slice %10 {offsets = [0, 0], sizes = [8, 128], strides = [1, 1]} : vector<8x384xf32> to vector<8x128xf32>
    %19 = vector.extract_strided_slice %10 {offsets = [0, 128], sizes = [8, 128], strides = [1, 1]} : vector<8x384xf32> to vector<8x128xf32>
    %20 = vector.extract_strided_slice %10 {offsets = [0, 256], sizes = [8, 128], strides = [1, 1]} : vector<8x384xf32> to vector<8x128xf32>
    %21 = arith.subf %19, %16 : vector<8x128xf32>
    %22 = arith.subf %20, %17 : vector<8x128xf32>
    %23 = arith.mulf %15, %21 : vector<8x128xf32>
    %24 = arith.mulf %18, %21 : vector<8x128xf32>
    %25 = tpu.concatenate %23, %24 in 0 : vector<8x128xf32>, vector<8x128xf32> -> vector<16x128xf32>
    %cst_15 = arith.constant dense<0.000000e+00> : vector<16x128xf32>
    %26 = tpu.matmul %25, %1, %cst_15 {dimension_numbers = #tpu.dot_dimension_numbers<[1], [0], [0], [1], [0, 0, 1, 1], [], []>} : vector<16x128xf32>, vector<128x128xf32>, vector<16x128xf32> -> vector<16x128xf32>
    %cst_16 = arith.constant 5.000000e-01 : f32
    %27 = vector.broadcast %cst_16 : f32 to vector<16x128xf32>
    %28 = arith.mulf %27, %26 : vector<16x128xf32>
    %29 = math.tanh %28 : vector<16x128xf32>
    %cst_17 = arith.constant 5.000000e-01 : f32
    %30 = vector.broadcast %cst_17 : f32 to vector<16x128xf32>
    %31 = arith.mulf %30, %29 : vector<16x128xf32>
    %cst_18 = arith.constant 5.000000e-01 : f32
    %32 = vector.broadcast %cst_18 : f32 to vector<16x128xf32>
    %33 = arith.addf %31, %32 : vector<16x128xf32>
    %34 = tpu.concatenate %17, %17 in 0 : vector<8x128xf32>, vector<8x128xf32> -> vector<16x128xf32>
    %35 = tpu.concatenate %22, %22 in 0 : vector<8x128xf32>, vector<8x128xf32> -> vector<16x128xf32>
    %36 = arith.mulf %33, %35 : vector<16x128xf32>
    %37 = arith.addf %34, %36 : vector<16x128xf32>
    %c0_19 = arith.constant 0 : index
    %c0_20 = arith.constant 0 : index
    %c0_21 = arith.constant 0 : index
    %38 = vector.load %arg5[%c0_19, %c0_20, %c0_21] : memref<2x128x32xf32, #tpu.memory_space<vmem>>, vector<1x128x32xf32>
    %39 = vector.shape_cast %38 : vector<1x128x32xf32> to vector<128x32xf32>
    %cst_22 = arith.constant dense<0.000000e+00> : vector<16x32xf32>
    %40 = tpu.matmul %37, %39, %cst_22 {dimension_numbers = #tpu.dot_dimension_numbers<[1], [0], [0], [1], [0, 0, 1, 1], [], []>} : vector<16x128xf32>, vector<128x32xf32>, vector<16x32xf32> -> vector<16x32xf32>
    %c0_23 = arith.constant 0 : index
    %c0_24 = arith.constant 0 : index
    %c0_25 = arith.constant 0 : index
    %41 = vector.load %arg6[%c0_23, %c0_24, %c0_25] : memref<2x1x32xf32, #tpu.memory_space<vmem>>, vector<1x1x32xf32>
    %42 = vector.shape_cast %41 : vector<1x1x32xf32> to vector<1x32xf32>
    %43 = vector.broadcast %42 : vector<1x32xf32> to vector<16x32xf32>
    %44 = arith.addf %40, %43 : vector<16x32xf32>
    %45 = arith.addf %44, %14 : vector<16x32xf32>
    %c0_26 = arith.constant 0 : index
    %c0_27 = arith.constant 0 : index
    %c0_28 = arith.constant 0 : index
    %46 = vector.load %arg7[%c0_26, %c0_27, %c0_28] : memref<2x1x32xf32, #tpu.memory_space<vmem>>, vector<1x1x32xf32>
    %47 = vector.shape_cast %46 : vector<1x1x32xf32> to vector<1x32xf32>
    %c0_29 = arith.constant 0 : index
    %c0_30 = arith.constant 0 : index
    %c0_31 = arith.constant 0 : index
    %48 = vector.load %arg8[%c0_29, %c0_30, %c0_31] : memref<2x1x32xf32, #tpu.memory_space<vmem>>, vector<1x1x32xf32>
    %49 = vector.shape_cast %48 : vector<1x1x32xf32> to vector<1x32xf32>
    %cst_32 = arith.constant dense<0.000000e+00> : vector<16xf32>
    %50 = vector.multi_reduction <add>, %45, %cst_32 [1] : vector<16x32xf32> to vector<16xf32>
    %51 = vector.shape_cast %50 : vector<16xf32> to vector<16x1xf32>
    %52 = arith.mulf %45, %45 : vector<16x32xf32>
    %cst_33 = arith.constant dense<0.000000e+00> : vector<16xf32>
    %53 = vector.multi_reduction <add>, %52, %cst_33 [1] : vector<16x32xf32> to vector<16xf32>
    %54 = vector.shape_cast %53 : vector<16xf32> to vector<16x1xf32>
    %cst_34 = arith.constant 3.125000e-02 : f32
    %55 = vector.broadcast %cst_34 : f32 to vector<16x1xf32>
    %56 = arith.mulf %51, %55 : vector<16x1xf32>
    %cst_35 = arith.constant 3.125000e-02 : f32
    %57 = vector.broadcast %cst_35 : f32 to vector<16x1xf32>
    %58 = arith.mulf %54, %57 : vector<16x1xf32>
    %59 = arith.mulf %56, %56 : vector<16x1xf32>
    %60 = arith.subf %58, %59 : vector<16x1xf32>
    %61 = vector.broadcast %56 : vector<16x1xf32> to vector<16x32xf32>
    %62 = arith.subf %45, %61 : vector<16x32xf32>
    %cst_36 = arith.constant 9.99999974E-6 : f32
    %63 = vector.broadcast %cst_36 : f32 to vector<16x1xf32>
    %64 = arith.addf %60, %63 : vector<16x1xf32>
    %65 = math.rsqrt %64 : vector<16x1xf32>
    %66 = vector.broadcast %65 : vector<16x1xf32> to vector<16x32xf32>
    %67 = arith.mulf %62, %66 : vector<16x32xf32>
    %68 = vector.broadcast %47 : vector<1x32xf32> to vector<16x32xf32>
    %69 = arith.mulf %67, %68 : vector<16x32xf32>
    %70 = vector.broadcast %49 : vector<1x32xf32> to vector<16x32xf32>
    %71 = arith.addf %69, %70 : vector<16x32xf32>
    %c0_37 = arith.constant 0 : index
    %c0_38 = arith.constant 0 : index
    %c0_39 = arith.constant 0 : index
    %72 = vector.load %arg9[%c0_37, %c0_38, %c0_39] : memref<2x32x128xf32, #tpu.memory_space<vmem>>, vector<1x32x128xf32>
    %73 = vector.shape_cast %72 : vector<1x32x128xf32> to vector<32x128xf32>
    %cst_40 = arith.constant dense<0.000000e+00> : vector<16x128xf32>
    %74 = tpu.matmul %71, %73, %cst_40 {dimension_numbers = #tpu.dot_dimension_numbers<[1], [0], [0], [1], [0, 0, 1, 1], [], []>} : vector<16x32xf32>, vector<32x128xf32>, vector<16x128xf32> -> vector<16x128xf32>
    %c0_41 = arith.constant 0 : index
    %c0_42 = arith.constant 0 : index
    %c0_43 = arith.constant 0 : index
    %75 = vector.load %arg10[%c0_41, %c0_42, %c0_43] : memref<2x1x128xf32, #tpu.memory_space<vmem>>, vector<1x1x128xf32>
    %76 = vector.shape_cast %75 : vector<1x1x128xf32> to vector<1x128xf32>
    %77 = vector.broadcast %76 : vector<1x128xf32> to vector<16x128xf32>
    %78 = arith.addf %74, %77 : vector<16x128xf32>
    %cst_44 = arith.constant 0.000000e+00 : f32
    %79 = vector.broadcast %cst_44 : f32 to vector<16x128xf32>
    %80 = arith.maximumf %78, %79 : vector<16x128xf32>
    %c0_45 = arith.constant 0 : index
    %c0_46 = arith.constant 0 : index
    %c0_47 = arith.constant 0 : index
    %81 = vector.load %arg11[%c0_45, %c0_46, %c0_47] : memref<2x128x32xf32, #tpu.memory_space<vmem>>, vector<1x128x32xf32>
    %82 = vector.shape_cast %81 : vector<1x128x32xf32> to vector<128x32xf32>
    %cst_48 = arith.constant dense<0.000000e+00> : vector<16x32xf32>
    %83 = tpu.matmul %80, %82, %cst_48 {dimension_numbers = #tpu.dot_dimension_numbers<[1], [0], [0], [1], [0, 0, 1, 1], [], []>} : vector<16x128xf32>, vector<128x32xf32>, vector<16x32xf32> -> vector<16x32xf32>
    %c0_49 = arith.constant 0 : index
    %c0_50 = arith.constant 0 : index
    %c0_51 = arith.constant 0 : index
    %84 = vector.load %arg12[%c0_49, %c0_50, %c0_51] : memref<2x1x32xf32, #tpu.memory_space<vmem>>, vector<1x1x32xf32>
    %85 = vector.shape_cast %84 : vector<1x1x32xf32> to vector<1x32xf32>
    %86 = vector.broadcast %85 : vector<1x32xf32> to vector<16x32xf32>
    %87 = arith.addf %83, %86 : vector<16x32xf32>
    %88 = arith.addf %87, %71 : vector<16x32xf32>
    %c0_52 = arith.constant 0 : index
    %c0_53 = arith.constant 0 : index
    %c0_54 = arith.constant 0 : index
    %89 = vector.load %arg13[%c0_52, %c0_53, %c0_54] : memref<2x1x32xf32, #tpu.memory_space<vmem>>, vector<1x1x32xf32>
    %90 = vector.shape_cast %89 : vector<1x1x32xf32> to vector<1x32xf32>
    %c0_55 = arith.constant 0 : index
    %c0_56 = arith.constant 0 : index
    %c0_57 = arith.constant 0 : index
    %91 = vector.load %arg14[%c0_55, %c0_56, %c0_57] : memref<2x1x32xf32, #tpu.memory_space<vmem>>, vector<1x1x32xf32>
    %92 = vector.shape_cast %91 : vector<1x1x32xf32> to vector<1x32xf32>
    %cst_58 = arith.constant dense<0.000000e+00> : vector<16xf32>
    %93 = vector.multi_reduction <add>, %88, %cst_58 [1] : vector<16x32xf32> to vector<16xf32>
    %94 = vector.shape_cast %93 : vector<16xf32> to vector<16x1xf32>
    %95 = arith.mulf %88, %88 : vector<16x32xf32>
    %cst_59 = arith.constant dense<0.000000e+00> : vector<16xf32>
    %96 = vector.multi_reduction <add>, %95, %cst_59 [1] : vector<16x32xf32> to vector<16xf32>
    %97 = vector.shape_cast %96 : vector<16xf32> to vector<16x1xf32>
    %cst_60 = arith.constant 3.125000e-02 : f32
    %98 = vector.broadcast %cst_60 : f32 to vector<16x1xf32>
    %99 = arith.mulf %94, %98 : vector<16x1xf32>
    %cst_61 = arith.constant 3.125000e-02 : f32
    %100 = vector.broadcast %cst_61 : f32 to vector<16x1xf32>
    %101 = arith.mulf %97, %100 : vector<16x1xf32>
    %102 = arith.mulf %99, %99 : vector<16x1xf32>
    %103 = arith.subf %101, %102 : vector<16x1xf32>
    %104 = vector.broadcast %99 : vector<16x1xf32> to vector<16x32xf32>
    %105 = arith.subf %88, %104 : vector<16x32xf32>
    %cst_62 = arith.constant 9.99999974E-6 : f32
    %106 = vector.broadcast %cst_62 : f32 to vector<16x1xf32>
    %107 = arith.addf %103, %106 : vector<16x1xf32>
    %108 = math.rsqrt %107 : vector<16x1xf32>
    %109 = vector.broadcast %108 : vector<16x1xf32> to vector<16x32xf32>
    %110 = arith.mulf %105, %109 : vector<16x32xf32>
    %111 = vector.broadcast %90 : vector<1x32xf32> to vector<16x32xf32>
    %112 = arith.mulf %110, %111 : vector<16x32xf32>
    %113 = vector.broadcast %92 : vector<1x32xf32> to vector<16x32xf32>
    %114 = arith.addf %112, %113 : vector<16x32xf32>
    %c1 = arith.constant 1 : index
    %c0_63 = arith.constant 0 : index
    %c0_64 = arith.constant 0 : index
    %115 = vector.load %arg4[%c1, %c0_63, %c0_64] : memref<2x32x384xf32, #tpu.memory_space<vmem>>, vector<1x32x384xf32>
    %116 = vector.shape_cast %115 : vector<1x32x384xf32> to vector<32x384xf32>
    %cst_65 = arith.constant dense<0.000000e+00> : vector<16x384xf32>
    %117 = tpu.matmul %114, %116, %cst_65 {dimension_numbers = #tpu.dot_dimension_numbers<[1], [0], [0], [1], [0, 0, 1, 1], [], []>} : vector<16x32xf32>, vector<32x384xf32>, vector<16x384xf32> -> vector<16x384xf32>
    %118 = vector.extract_strided_slice %117 {offsets = [0, 0], sizes = [8, 128], strides = [1, 1]} : vector<16x384xf32> to vector<8x128xf32>
    %119 = vector.extract_strided_slice %117 {offsets = [0, 128], sizes = [8, 128], strides = [1, 1]} : vector<16x384xf32> to vector<8x128xf32>
    %120 = vector.extract_strided_slice %117 {offsets = [0, 256], sizes = [8, 128], strides = [1, 1]} : vector<16x384xf32> to vector<8x128xf32>
    %121 = vector.extract_strided_slice %117 {offsets = [8, 0], sizes = [8, 128], strides = [1, 1]} : vector<16x384xf32> to vector<8x128xf32>
    %122 = vector.extract_strided_slice %117 {offsets = [8, 128], sizes = [8, 128], strides = [1, 1]} : vector<16x384xf32> to vector<8x128xf32>
    %123 = vector.extract_strided_slice %117 {offsets = [8, 256], sizes = [8, 128], strides = [1, 1]} : vector<16x384xf32> to vector<8x128xf32>
    %124 = arith.subf %122, %119 : vector<8x128xf32>
    %125 = arith.subf %123, %120 : vector<8x128xf32>
    %126 = arith.mulf %118, %124 : vector<8x128xf32>
    %127 = arith.mulf %121, %124 : vector<8x128xf32>
    %128 = tpu.concatenate %126, %127 in 0 : vector<8x128xf32>, vector<8x128xf32> -> vector<16x128xf32>
    %cst_66 = arith.constant dense<0.000000e+00> : vector<16x128xf32>
    %129 = tpu.matmul %128, %1, %cst_66 {dimension_numbers = #tpu.dot_dimension_numbers<[1], [0], [0], [1], [0, 0, 1, 1], [], []>} : vector<16x128xf32>, vector<128x128xf32>, vector<16x128xf32> -> vector<16x128xf32>
    %cst_67 = arith.constant 5.000000e-01 : f32
    %130 = vector.broadcast %cst_67 : f32 to vector<16x128xf32>
    %131 = arith.mulf %130, %129 : vector<16x128xf32>
    %132 = math.tanh %131 : vector<16x128xf32>
    %cst_68 = arith.constant 5.000000e-01 : f32
    %133 = vector.broadcast %cst_68 : f32 to vector<16x128xf32>
    %134 = arith.mulf %133, %132 : vector<16x128xf32>
    %cst_69 = arith.constant 5.000000e-01 : f32
    %135 = vector.broadcast %cst_69 : f32 to vector<16x128xf32>
    %136 = arith.addf %134, %135 : vector<16x128xf32>
    %137 = tpu.concatenate %120, %120 in 0 : vector<8x128xf32>, vector<8x128xf32> -> vector<16x128xf32>
    %138 = tpu.concatenate %125, %125 in 0 : vector<8x128xf32>, vector<8x128xf32> -> vector<16x128xf32>
    %139 = arith.mulf %136, %138 : vector<16x128xf32>
    %140 = arith.addf %137, %139 : vector<16x128xf32>
    %c1_70 = arith.constant 1 : index
    %c0_71 = arith.constant 0 : index
    %c0_72 = arith.constant 0 : index
    %141 = vector.load %arg5[%c1_70, %c0_71, %c0_72] : memref<2x128x32xf32, #tpu.memory_space<vmem>>, vector<1x128x32xf32>
    %142 = vector.shape_cast %141 : vector<1x128x32xf32> to vector<128x32xf32>
    %cst_73 = arith.constant dense<0.000000e+00> : vector<16x32xf32>
    %143 = tpu.matmul %140, %142, %cst_73 {dimension_numbers = #tpu.dot_dimension_numbers<[1], [0], [0], [1], [0, 0, 1, 1], [], []>} : vector<16x128xf32>, vector<128x32xf32>, vector<16x32xf32> -> vector<16x32xf32>
    %c1_74 = arith.constant 1 : index
    %c0_75 = arith.constant 0 : index
    %c0_76 = arith.constant 0 : index
    %144 = vector.load %arg6[%c1_74, %c0_75, %c0_76] : memref<2x1x32xf32, #tpu.memory_space<vmem>>, vector<1x1x32xf32>
    %145 = vector.shape_cast %144 : vector<1x1x32xf32> to vector<1x32xf32>
    %146 = vector.broadcast %145 : vector<1x32xf32> to vector<16x32xf32>
    %147 = arith.addf %143, %146 : vector<16x32xf32>
    %148 = arith.addf %147, %114 : vector<16x32xf32>
    %c1_77 = arith.constant 1 : index
    %c0_78 = arith.constant 0 : index
    %c0_79 = arith.constant 0 : index
    %149 = vector.load %arg7[%c1_77, %c0_78, %c0_79] : memref<2x1x32xf32, #tpu.memory_space<vmem>>, vector<1x1x32xf32>
    %150 = vector.shape_cast %149 : vector<1x1x32xf32> to vector<1x32xf32>
    %c1_80 = arith.constant 1 : index
    %c0_81 = arith.constant 0 : index
    %c0_82 = arith.constant 0 : index
    %151 = vector.load %arg8[%c1_80, %c0_81, %c0_82] : memref<2x1x32xf32, #tpu.memory_space<vmem>>, vector<1x1x32xf32>
    %152 = vector.shape_cast %151 : vector<1x1x32xf32> to vector<1x32xf32>
    %cst_83 = arith.constant dense<0.000000e+00> : vector<16xf32>
    %153 = vector.multi_reduction <add>, %148, %cst_83 [1] : vector<16x32xf32> to vector<16xf32>
    %154 = vector.shape_cast %153 : vector<16xf32> to vector<16x1xf32>
    %155 = arith.mulf %148, %148 : vector<16x32xf32>
    %cst_84 = arith.constant dense<0.000000e+00> : vector<16xf32>
    %156 = vector.multi_reduction <add>, %155, %cst_84 [1] : vector<16x32xf32> to vector<16xf32>
    %157 = vector.shape_cast %156 : vector<16xf32> to vector<16x1xf32>
    %cst_85 = arith.constant 3.125000e-02 : f32
    %158 = vector.broadcast %cst_85 : f32 to vector<16x1xf32>
    %159 = arith.mulf %154, %158 : vector<16x1xf32>
    %cst_86 = arith.constant 3.125000e-02 : f32
    %160 = vector.broadcast %cst_86 : f32 to vector<16x1xf32>
    %161 = arith.mulf %157, %160 : vector<16x1xf32>
    %162 = arith.mulf %159, %159 : vector<16x1xf32>
    %163 = arith.subf %161, %162 : vector<16x1xf32>
    %164 = vector.broadcast %159 : vector<16x1xf32> to vector<16x32xf32>
    %165 = arith.subf %148, %164 : vector<16x32xf32>
    %cst_87 = arith.constant 9.99999974E-6 : f32
    %166 = vector.broadcast %cst_87 : f32 to vector<16x1xf32>
    %167 = arith.addf %163, %166 : vector<16x1xf32>
    %168 = math.rsqrt %167 : vector<16x1xf32>
    %169 = vector.broadcast %168 : vector<16x1xf32> to vector<16x32xf32>
    %170 = arith.mulf %165, %169 : vector<16x32xf32>
    %171 = vector.broadcast %150 : vector<1x32xf32> to vector<16x32xf32>
    %172 = arith.mulf %170, %171 : vector<16x32xf32>
    %173 = vector.broadcast %152 : vector<1x32xf32> to vector<16x32xf32>
    %174 = arith.addf %172, %173 : vector<16x32xf32>
    %c1_88 = arith.constant 1 : index
    %c0_89 = arith.constant 0 : index
    %c0_90 = arith.constant 0 : index
    %175 = vector.load %arg9[%c1_88, %c0_89, %c0_90] : memref<2x32x128xf32, #tpu.memory_space<vmem>>, vector<1x32x128xf32>
    %176 = vector.shape_cast %175 : vector<1x32x128xf32> to vector<32x128xf32>
    %cst_91 = arith.constant dense<0.000000e+00> : vector<16x128xf32>
    %177 = tpu.matmul %174, %176, %cst_91 {dimension_numbers = #tpu.dot_dimension_numbers<[1], [0], [0], [1], [0, 0, 1, 1], [], []>} : vector<16x32xf32>, vector<32x128xf32>, vector<16x128xf32> -> vector<16x128xf32>
    %c1_92 = arith.constant 1 : index
    %c0_93 = arith.constant 0 : index
    %c0_94 = arith.constant 0 : index
    %178 = vector.load %arg10[%c1_92, %c0_93, %c0_94] : memref<2x1x128xf32, #tpu.memory_space<vmem>>, vector<1x1x128xf32>
    %179 = vector.shape_cast %178 : vector<1x1x128xf32> to vector<1x128xf32>
    %180 = vector.broadcast %179 : vector<1x128xf32> to vector<16x128xf32>
    %181 = arith.addf %177, %180 : vector<16x128xf32>
    %cst_95 = arith.constant 0.000000e+00 : f32
    %182 = vector.broadcast %cst_95 : f32 to vector<16x128xf32>
    %183 = arith.maximumf %181, %182 : vector<16x128xf32>
    %c1_96 = arith.constant 1 : index
    %c0_97 = arith.constant 0 : index
    %c0_98 = arith.constant 0 : index
    %184 = vector.load %arg11[%c1_96, %c0_97, %c0_98] : memref<2x128x32xf32, #tpu.memory_space<vmem>>, vector<1x128x32xf32>
    %185 = vector.shape_cast %184 : vector<1x128x32xf32> to vector<128x32xf32>
    %cst_99 = arith.constant dense<0.000000e+00> : vector<16x32xf32>
    %186 = tpu.matmul %183, %185, %cst_99 {dimension_numbers = #tpu.dot_dimension_numbers<[1], [0], [0], [1], [0, 0, 1, 1], [], []>} : vector<16x128xf32>, vector<128x32xf32>, vector<16x32xf32> -> vector<16x32xf32>
    %c1_100 = arith.constant 1 : index
    %c0_101 = arith.constant 0 : index
    %c0_102 = arith.constant 0 : index
    %187 = vector.load %arg12[%c1_100, %c0_101, %c0_102] : memref<2x1x32xf32, #tpu.memory_space<vmem>>, vector<1x1x32xf32>
    %188 = vector.shape_cast %187 : vector<1x1x32xf32> to vector<1x32xf32>
    %189 = vector.broadcast %188 : vector<1x32xf32> to vector<16x32xf32>
    %190 = arith.addf %186, %189 : vector<16x32xf32>
    %191 = arith.addf %190, %174 : vector<16x32xf32>
    %c1_103 = arith.constant 1 : index
    %c0_104 = arith.constant 0 : index
    %c0_105 = arith.constant 0 : index
    %192 = vector.load %arg13[%c1_103, %c0_104, %c0_105] : memref<2x1x32xf32, #tpu.memory_space<vmem>>, vector<1x1x32xf32>
    %193 = vector.shape_cast %192 : vector<1x1x32xf32> to vector<1x32xf32>
    %c1_106 = arith.constant 1 : index
    %c0_107 = arith.constant 0 : index
    %c0_108 = arith.constant 0 : index
    %194 = vector.load %arg14[%c1_106, %c0_107, %c0_108] : memref<2x1x32xf32, #tpu.memory_space<vmem>>, vector<1x1x32xf32>
    %195 = vector.shape_cast %194 : vector<1x1x32xf32> to vector<1x32xf32>
    %cst_109 = arith.constant dense<0.000000e+00> : vector<16xf32>
    %196 = vector.multi_reduction <add>, %191, %cst_109 [1] : vector<16x32xf32> to vector<16xf32>
    %197 = vector.shape_cast %196 : vector<16xf32> to vector<16x1xf32>
    %198 = arith.mulf %191, %191 : vector<16x32xf32>
    %cst_110 = arith.constant dense<0.000000e+00> : vector<16xf32>
    %199 = vector.multi_reduction <add>, %198, %cst_110 [1] : vector<16x32xf32> to vector<16xf32>
    %200 = vector.shape_cast %199 : vector<16xf32> to vector<16x1xf32>
    %cst_111 = arith.constant 3.125000e-02 : f32
    %201 = vector.broadcast %cst_111 : f32 to vector<16x1xf32>
    %202 = arith.mulf %197, %201 : vector<16x1xf32>
    %cst_112 = arith.constant 3.125000e-02 : f32
    %203 = vector.broadcast %cst_112 : f32 to vector<16x1xf32>
    %204 = arith.mulf %200, %203 : vector<16x1xf32>
    %205 = arith.mulf %202, %202 : vector<16x1xf32>
    %206 = arith.subf %204, %205 : vector<16x1xf32>
    %207 = vector.broadcast %202 : vector<16x1xf32> to vector<16x32xf32>
    %208 = arith.subf %191, %207 : vector<16x32xf32>
    %cst_113 = arith.constant 9.99999974E-6 : f32
    %209 = vector.broadcast %cst_113 : f32 to vector<16x1xf32>
    %210 = arith.addf %206, %209 : vector<16x1xf32>
    %211 = math.rsqrt %210 : vector<16x1xf32>
    %212 = vector.broadcast %211 : vector<16x1xf32> to vector<16x32xf32>
    %213 = arith.mulf %208, %212 : vector<16x32xf32>
    %214 = vector.broadcast %193 : vector<1x32xf32> to vector<16x32xf32>
    %215 = arith.mulf %213, %214 : vector<16x32xf32>
    %216 = vector.broadcast %195 : vector<1x32xf32> to vector<16x32xf32>
    %217 = arith.addf %215, %216 : vector<16x32xf32>
    %c0_114 = arith.constant 0 : index
    %c0_115 = arith.constant 0 : index
    %218 = vector.load %arg16[%c0_114, %c0_115] : memref<32x128xf32, #tpu.memory_space<vmem>>, vector<32x128xf32>
    %cst_116 = arith.constant dense<0.000000e+00> : vector<16x128xf32>
    %219 = tpu.matmul %217, %218, %cst_116 {dimension_numbers = #tpu.dot_dimension_numbers<[1], [0], [0], [1], [0, 0, 1, 1], [], []>} : vector<16x32xf32>, vector<32x128xf32>, vector<16x128xf32> -> vector<16x128xf32>
    %c0_117 = arith.constant 0 : index
    %c0_118 = arith.constant 0 : index
    %220 = vector.load %arg17[%c0_117, %c0_118] : memref<1x128xf32, #tpu.memory_space<vmem>>, vector<1x128xf32>
    %221 = vector.broadcast %220 : vector<1x128xf32> to vector<16x128xf32>
    %222 = arith.addf %219, %221 : vector<16x128xf32>
    %c0_119 = arith.constant 0 : index
    %c0_120 = arith.constant 0 : index
    %223 = vector.load %arg18[%c0_119, %c0_120] : memref<16x128xf32, #tpu.memory_space<vmem>>, vector<16x128xf32>
    tpu.vector_store %arg18[%c0_119, %c0_120], %222 {strides = array<i32>} : memref<16x128xf32, #tpu.memory_space<vmem>>, vector<16x128xf32>,
    return
  }
}

</mosaic_0001>

<llo_original>
// kernel: transformer_forward.1
$region0: #{transformer_forward.1}
  #allocation0 [shape = 'u32[]', space=smem, size = 0x4, offset = 0x4, fixed_abs, tag = 'smem constant byte address 0x4 - core index']
  #allocation1 [shape = 'u32[144,128]{1,0:T(1,128)}', space=vmem, size = 0x12000, scoped, tag = 'internal scratch']
  %s0 = inlined_call_operand.vmem [shape: f32[8,8], index: 0, kind: input, shape index: {}]
  %s1 = inlined_call_operand.vmem [shape: f32[8,32], index: 1, kind: input, shape index: {}]
  %s2 = inlined_call_operand.vmem [shape: f32[8,512], index: 2, kind: input, shape index: {}]
  %s3 = inlined_call_operand.vmem [shape: f32[1,512], index: 3, kind: input, shape index: {}]
  %s4 = inlined_call_operand.vmem [shape: f32[2,32,384], index: 4, kind: input, shape index: {}]
  %s5 = inlined_call_operand.vmem [shape: f32[2,128,32], index: 5, kind: input, shape index: {}]
  %s6 = inlined_call_operand.vmem [shape: f32[2,1,32], index: 6, kind: input, shape index: {}]
  %s7 = inlined_call_operand.vmem [shape: f32[2,1,32], index: 7, kind: input, shape index: {}]
  %s8 = inlined_call_operand.vmem [shape: f32[2,1,32], index: 8, kind: input, shape index: {}]
  %s9 = inlined_call_operand.vmem [shape: f32[2,32,128], index: 9, kind: input, shape index: {}]
  %s10 = inlined_call_operand.vmem [shape: f32[2,1,128], index: 10, kind: input, shape index: {}]
  %s11 = inlined_call_operand.vmem [shape: f32[2,128,32], index: 11, kind: input, shape index: {}]
  %s12 = inlined_call_operand.vmem [shape: f32[2,1,32], index: 12, kind: input, shape index: {}]
  %s13 = inlined_call_operand.vmem [shape: f32[2,1,32], index: 13, kind: input, shape index: {}]
  %s14 = inlined_call_operand.vmem [shape: f32[2,1,32], index: 14, kind: input, shape index: {}]
  %s15 = inlined_call_operand.vmem [shape: f32[128,128], index: 15, kind: input, shape index: {}]
  %s16 = inlined_call_operand.vmem [shape: f32[32,128], index: 16, kind: input, shape index: {}]
  %s17 = inlined_call_operand.vmem [shape: f32[1,128], index: 17, kind: input, shape index: {}]
  %s18 = inlined_call_operand.vmem [shape: f32[16,128], index: 18, kind: output, shape index: {0}]
  %s19 = inlined_call_operand.vmem [shape: f32[8,128], index: 19, kind: output, shape index: {1}]
  %20 = xla_tuple %s18, %s19
  %s21 = sld [smem:[#allocation0]]
  $region90: #{transformer_forward.1} parent=0
    _
  %s23 = ssub.s32 1, %s21
  %s24 = scalar_select 0, %s23, %s21
  // Predicated region
  $region2: #{transformer_forward.1} parent=0 // pred_check
    _
  $region3: #{transformer_forward.1} parent=0 // pred_check_branch
    %26 = sbr.rel (0) target = $region5
  $region4: #{transformer_forward.1} parent=0 // pred_region
    _
  $region5: #{transformer_forward.1} parent=0 // pred_fallthru
    _
  // Predicated region
  $region6: #{transformer_forward.1} parent=0 // pred_check
    _
  $region7: #{transformer_forward.1} parent=0 // pred_check_branch
    %28 = sbr.rel (0) target = $region9
  $region8: #{transformer_forward.1} parent=0 // pred_region
    _
  $region9: #{transformer_forward.1} parent=0 // pred_fallthru
    _
  // Predicated region
  $region10: #{transformer_forward.1} parent=0 // pred_check
    _
  $region11: #{transformer_forward.1} parent=0 // pred_check_branch
    %30 = sbr.rel (0) target = $region13
  $region12: #{transformer_forward.1} parent=0 // pred_region
    _
  $region13: #{transformer_forward.1} parent=0 // pred_fallthru
    _
  // Predicated region
  $region14: #{transformer_forward.1} parent=0 // pred_check
    _
  $region15: #{transformer_forward.1} parent=0 // pred_check_branch
    %32 = sbr.rel (0) target = $region17
  $region16: #{transformer_forward.1} parent=0 // pred_region
    _
  $region17: #{transformer_forward.1} parent=0 // pred_fallthru
    _
  // Predicated region
  $region18: #{transformer_forward.1} parent=0 // pred_check
    _
  $region19: #{transformer_forward.1} parent=0 // pred_check_branch
    %34 = sbr.rel (0) target = $region21
  $region20: #{transformer_forward.1} parent=0 // pred_region
    _
  $region21: #{transformer_forward.1} parent=0 // pred_fallthru
    _
  // Predicated region
  $region22: #{transformer_forward.1} parent=0 // pred_check
    _
  $region23: #{transformer_forward.1} parent=0 // pred_check_branch
    %36 = sbr.rel (0) target = $region25
  $region24: #{transformer_forward.1} parent=0 // pred_region
    _
  $region25: #{transformer_forward.1} parent=0 // pred_fallthru
    _
  // Predicated region
  $region26: #{transformer_forward.1} parent=0 // pred_check
    _
  $region27: #{transformer_forward.1} parent=0 // pred_check_branch
    %38 = sbr.rel (0) target = $region29
  $region28: #{transformer_forward.1} parent=0 // pred_region
    _
  $region29: #{transformer_forward.1} parent=0 // pred_fallthru
    _
  // Predicated region
  $region30: #{transformer_forward.1} parent=0 // pred_check
    _
  $region31: #{transformer_forward.1} parent=0 // pred_check_branch
    %40 = sbr.rel (0) target = $region33
  $region32: #{transformer_forward.1} parent=0 // pred_region
    _
  $region33: #{transformer_forward.1} parent=0 // pred_fallthru
    _
  // Predicated region
  $region34: #{transformer_forward.1} parent=0 // pred_check
    _
  $region35: #{transformer_forward.1} parent=0 // pred_check_branch
    %42 = sbr.rel (0) target = $region37
  $region36: #{transformer_forward.1} parent=0 // pred_region
    _
  $region37: #{transformer_forward.1} parent=0 // pred_fallthru
    _
  // Predicated region
  $region38: #{transformer_forward.1} parent=0 // pred_check
    _
  $region39: #{transformer_forward.1} parent=0 // pred_check_branch
    %44 = sbr.rel (0) target = $region41
  $region40: #{transformer_forward.1} parent=0 // pred_region
    _
  $region41: #{transformer_forward.1} parent=0 // pred_fallthru
    _
  // Predicated region
  $region42: #{transformer_forward.1} parent=0 // pred_check
    _
  $region43: #{transformer_forward.1} parent=0 // pred_check_branch
    %46 = sbr.rel (0) target = $region45
  $region44: #{transformer_forward.1} parent=0 // pred_region
    _
  $region45: #{transformer_forward.1} parent=0 // pred_fallthru
    _
  // Predicated region
  $region46: #{transformer_forward.1} parent=0 // pred_check
    _
  $region47: #{transformer_forward.1} parent=0 // pred_check_branch
    %48 = sbr.rel (0) target = $region49
  $region48: #{transformer_forward.1} parent=0 // pred_region
    _
  $region49: #{transformer_forward.1} parent=0 // pred_fallthru
    _
  // Predicated region
  $region50: #{transformer_forward.1} parent=0 // pred_check
    _
  $region51: #{transformer_forward.1} parent=0 // pred_check_branch
    %50 = sbr.rel (0) target = $region53
  $region52: #{transformer_forward.1} parent=0 // pred_region
    _
  $region53: #{transformer_forward.1} parent=0 // pred_fallthru
    _
  // Predicated region
  $region54: #{transformer_forward.1} parent=0 // pred_check
    _
  $region55: #{transformer_forward.1} parent=0 // pred_check_branch
    %52 = sbr.rel (0) target = $region57
  $region56: #{transformer_forward.1} parent=0 // pred_region
    _
  $region57: #{transformer_forward.1} parent=0 // pred_fallthru
    _
  // Predicated region
  $region58: #{transformer_forward.1} parent=0 // pred_check
    _
  $region59: #{transformer_forward.1} parent=0 // pred_check_branch
    %54 = sbr.rel (0) target = $region61
  $region60: #{transformer_forward.1} parent=0 // pred_region
    _
  $region61: #{transformer_forward.1} parent=0 // pred_fallthru
    _
  // Predicated region
  $region62: #{transformer_forward.1} parent=0 // pred_check
    _
  $region63: #{transformer_forward.1} parent=0 // pred_check_branch
    %56 = sbr.rel (0) target = $region65
  $region64: #{transformer_forward.1} parent=0 // pred_region
    _
  $region65: #{transformer_forward.1} parent=0 // pred_fallthru
    _
  // Predicated region
  $region66: #{transformer_forward.1} parent=0 // pred_check
    _
  $region67: #{transformer_forward.1} parent=0 // pred_check_branch
    %58 = sbr.rel (0) target = $region69
  $region68: #{transformer_forward.1} parent=0 // pred_region
    _
  $region69: #{transformer_forward.1} parent=0 // pred_fallthru
    _
  // Predicated region
  $region70: #{transformer_forward.1} parent=0 // pred_check
    _
  $region71: #{transformer_forward.1} parent=0 // pred_check_branch
    %60 = sbr.rel (0) target = $region73
  $region72: #{transformer_forward.1} parent=0 // pred_region
    _
  $region73: #{transformer_forward.1} parent=0 // pred_fallthru
    _
  %v61 = vld [vmem:[%s1] sm:$0xff]
  %v62 = vld [vmem:[%s15] sm:$0xff]
  %v63 = vld [vmem:[%s15 + $0x8] sm:$0xff]
  %v64 = vld [vmem:[%s15 + $0x10] sm:$0xff]
  %v65 = vld [vmem:[%s15 + $0x18] sm:$0xff]
  %v66 = vld [vmem:[%s15 + $0x20] sm:$0xff]
  %v67 = vld [vmem:[%s15 + $0x28] sm:$0xff]
  %v68 = vld [vmem:[%s15 + $0x30] sm:$0xff]
  %v69 = vld [vmem:[%s15 + $0x38] sm:$0xff]
  %v70 = vld [vmem:[%s15 + $0x40] sm:$0xff]
  %v71 = vld [vmem:[%s15 + $0x48] sm:$0xff]
  %v72 = vld [vmem:[%s15 + $0x50] sm:$0xff]
  %v73 = vld [vmem:[%s15 + $0x58] sm:$0xff]
  %v74 = vld [vmem:[%s15 + $0x60] sm:$0xff]
  %v75 = vld [vmem:[%s15 + $0x68] sm:$0xff]
  %v76 = vld [vmem:[%s15 + $0x70] sm:$0xff]
  %v77 = vld [vmem:[%s15 + $0x78] sm:$0xff]
  %v78 = vld [vmem:[%s0] sm:$0xff]
  %v79 = vld [vmem:[%s2] sm:$0xff]
  %v80 = vld [vmem:[%s2 + $0x8] sm:$0xff]
  %v81 = vld [vmem:[%s2 + $0x10] sm:$0xff]
  %v82 = vld [vmem:[%s2 + $0x18] sm:$0xff]
  %v83 = vld [vmem:[%s3] sm:$0xf]
  %v85 = vlaneseq
  %v86 = vshrl.u32 %v85, 7
  %v87 = vsub.s32 0, %v86
  %v88 = vrot.slane %v83, %v87
  %v89 = vlaneseq
  %v90 = vshrl.u32 %v89, 7
  %v91 = vsub.s32 1, %v90
  %v92 = vrot.slane %v83, %v91
  %v93 = vlaneseq
  %v94 = vshrl.u32 %v93, 7
  %v95 = vsub.s32 2, %v94
  %v96 = vrot.slane %v83, %v95
  %v97 = vlaneseq
  %v98 = vshrl.u32 %v97, 7
  %v99 = vsub.s32 3, %v98
  %v100 = vrot.slane %v83, %v99
  %vm105 = vcmask 64512
  %v107 = vsel %vm105, %v78, 0
  %109 = vmatprep.subr.mxu0 %v80
  %110 = vmatpush1.msra.mxu0 %v79
  %111 = vmatprep.subr.mxu0 0.0
  %112 = vmatpush1.msra.mxu0 0.0
  %113 = vmatprep.subr.mxu0 0.0
  %114 = vmatpush1.msra.mxu0 0.0
  %115 = vmatprep.subr.mxu0 0.0
  %116 = vmatpush1.msra.mxu0 0.0
  %117 = vmatprep.subr.mxu0 0.0
  %118 = vmatpush1.msra.mxu0 0.0
  %119 = vmatprep.subr.mxu0 0.0
  %120 = vmatpush1.msra.mxu0 0.0
  %121 = vmatprep.subr.mxu0 0.0
  %122 = vmatpush1.msra.mxu0 0.0
  %123 = vmatprep.subr.mxu0 0.0
  %124 = vmatpush1.msra.mxu0 0.0
  %125 = vmatprep.subr.mxu0 0.0
  %126 = vmatpush1.msra.mxu0 0.0
  %127 = vmatprep.subr.mxu0 0.0
  %128 = vmatpush1.msra.mxu0 0.0
  %129 = vmatprep.subr.mxu0 0.0
  %130 = vmatpush1.msra.mxu0 0.0
  %131 = vmatprep.subr.mxu0 0.0
  %132 = vmatpush1.msra.mxu0 0.0
  %133 = vmatprep.subr.mxu0 0.0
  %134 = vmatpush1.msra.mxu0 0.0
  %135 = vmatprep.subr.mxu0 0.0
  %136 = vmatpush1.msra.mxu0 0.0
  %137 = vmatprep.subr.mxu0 0.0
  %138 = vmatpush1.msra.mxu0 0.0
  %139 = vmatprep.subr.mxu0 0.0
  %140 = vmatpush1.msra.mxu0 0.0
  %141 = vmatprep.subr.mxu0 0.0
  %142 = vmatpush1.msra.mxu0 0.0
  %143 = vmatprep.subr.mxu0 0.0
  %144 = vmatpush1.msra.mxu0 0.0
  %145 = vmatprep.subr.mxu0 0.0
  %146 = vmatpush1.msra.mxu0 0.0
  %147 = vmatprep.subr.mxu0 0.0
  %148 = vmatpush1.msra.mxu0 0.0
  %149 = vmatprep.subr.mxu0 0.0
  %150 = vmatpush1.msra.mxu0 0.0
  %151 = vmatprep.subr.mxu0 0.0
  %152 = vmatpush1.msra.mxu0 0.0
  %153 = vmatprep.subr.mxu0 0.0
  %154 = vmatpush1.msra.mxu0 0.0
  %155 = vmatprep.subr.mxu0 0.0
  %156 = vmatpush1.msra.mxu0 0.0
  %157 = vmatprep.subr.mxu0 0.0
  %158 = vmatpush1.msra.mxu0 0.0
  %159 = vmatprep.subr.mxu0 0.0
  %160 = vmatpush1.msra.mxu0 0.0
  %161 = vmatprep.subr.mxu0 0.0
  %162 = vmatpush1.msra.mxu0 0.0
  %163 = vmatprep.subr.mxu0 0.0
  %164 = vmatpush1.msra.mxu0 0.0
  %165 = vmatprep.subr.mxu0 0.0
  %166 = vmatpush1.msra.mxu0 0.0
  %167 = vmatprep.subr.mxu0 0.0
  %168 = vmatpush1.msra.mxu0 0.0
  %169 = vmatprep.subr.mxu0 0.0
  %170 = vmatpush1.msra.mxu0 0.0
  %171 = vmatprep.subr.mxu0 0.0
  %172 = vmatpush1.msra.mxu0 0.0
  %173 = vmatprep.mubr.f32.mxu0 0.0
  %174 = vmatmul.mubr.f32.gmra.mrb[0].mxu0 %v107
  %v175 = vpop.f32.mrb[0].mxu0
  %v176 = vadd.f32 %v88, %v175
  %v177 = vpop.f32.mrb[0].mxu0
  %v178 = vadd.f32 %v92, %v177
  %179 = vdwg.mxu0
  %180 = vmatprep.subr.mxu0 %v82
  %181 = vmatpush1.msra.mxu0 %v81
  %182 = vmatprep.subr.mxu0 0.0
  %183 = vmatpush1.msra.mxu0 0.0
  %184 = vmatprep.subr.mxu0 0.0
  %185 = vmatpush1.msra.mxu0 0.0
  %186 = vmatprep.subr.mxu0 0.0
  %187 = vmatpush1.msra.mxu0 0.0
  %188 = vmatprep.subr.mxu0 0.0
  %189 = vmatpush1.msra.mxu0 0.0
  %190 = vmatprep.subr.mxu0 0.0
  %191 = vmatpush1.msra.mxu0 0.0
  %192 = vmatprep.subr.mxu0 0.0
  %193 = vmatpush1.msra.mxu0 0.0
  %194 = vmatprep.subr.mxu0 0.0
  %195 = vmatpush1.msra.mxu0 0.0
  %196 = vmatprep.subr.mxu0 0.0
  %197 = vmatpush1.msra.mxu0 0.0
  %198 = vmatprep.subr.mxu0 0.0
  %199 = vmatpush1.msra.mxu0 0.0
  %200 = vmatprep.subr.mxu0 0.0
  %201 = vmatpush1.msra.mxu0 0.0
  %202 = vmatprep.subr.mxu0 0.0
  %203 = vmatpush1.msra.mxu0 0.0
  %204 = vmatprep.subr.mxu0 0.0
  %205 = vmatpush1.msra.mxu0 0.0
  %206 = vmatprep.subr.mxu0 0.0
  %207 = vmatpush1.msra.mxu0 0.0
  %208 = vmatprep.subr.mxu0 0.0
  %209 = vmatpush1.msra.mxu0 0.0
  %210 = vmatprep.subr.mxu0 0.0
  %211 = vmatpush1.msra.mxu0 0.0
  %212 = vmatprep.subr.mxu0 0.0
  %213 = vmatpush1.msra.mxu0 0.0
  %214 = vmatprep.subr.mxu0 0.0
  %215 = vmatpush1.msra.mxu0 0.0
  %216 = vmatprep.subr.mxu0 0.0
  %217 = vmatpush1.msra.mxu0 0.0
  %218 = vmatprep.subr.mxu0 0.0
  %219 = vmatpush1.msra.mxu0 0.0
  %220 = vmatprep.subr.mxu0 0.0
  %221 = vmatpush1.msra.mxu0 0.0
  %222 = vmatprep.subr.mxu0 0.0
  %223 = vmatpush1.msra.mxu0 0.0
  %224 = vmatprep.subr.mxu0 0.0
  %225 = vmatpush1.msra.mxu0 0.0
  %226 = vmatprep.subr.mxu0 0.0
  %227 = vmatpush1.msra.mxu0 0.0
  %228 = vmatprep.subr.mxu0 0.0
  %229 = vmatpush1.msra.mxu0 0.0
  %230 = vmatprep.subr.mxu0 0.0
  %231 = vmatpush1.msra.mxu0 0.0
  %232 = vmatprep.subr.mxu0 0.0
  %233 = vmatpush1.msra.mxu0 0.0
  %234 = vmatprep.subr.mxu0 0.0
  %235 = vmatpush1.msra.mxu0 0.0
  %236 = vmatprep.subr.mxu0 0.0
  %237 = vmatpush1.msra.mxu0 0.0
  %238 = vmatprep.subr.mxu0 0.0
  %239 = vmatpush1.msra.mxu0 0.0
  %240 = vmatprep.subr.mxu0 0.0
  %241 = vmatpush1.msra.mxu0 0.0
  %242 = vmatprep.subr.mxu0 0.0
  %243 = vmatpush1.msra.mxu0 0.0
  %244 = vmatprep.mubr.f32.mxu0 0.0
  %245 = vmatmul.mubr.f32.gmra.mrb[0].mxu0 %v107
  %v246 = vpop.f32.mrb[0].mxu0
  %v247 = vadd.f32 %v96, %v246
  %v248 = vpop.f32.mrb[0].mxu0
  %v249 = vadd.f32 %v100, %v248
  %250 = vdwg.mxu0
  %v251 = vld [vmem:[%s4] sm:$0xff]
  %v252 = vld [vmem:[%s4 + $0x8] sm:$0xff]
  %v253 = vld [vmem:[%s4 + $0x10] sm:$0xff]
  %v254 = vld [vmem:[%s4 + $0x18] sm:$0xff]
  %v255 = vld [vmem:[%s4 + $0x20] sm:$0xff]
  %v256 = vld [vmem:[%s4 + $0x28] sm:$0xff]
  %v257 = vld [vmem:[%s4 + $0x30] sm:$0xff]
  %v258 = vld [vmem:[%s4 + $0x38] sm:$0xff]
  %v259 = vld [vmem:[%s4 + $0x40] sm:$0xff]
  %v260 = vld [vmem:[%s4 + $0x48] sm:$0xff]
  %v261 = vld [vmem:[%s4 + $0x50] sm:$0xff]
  %v262 = vld [vmem:[%s4 + $0x58] sm:$0xff]
  %vm263 = vcmask 261120
  %v265 = vsel %vm263, %v61, 0
  %267 = vmatprep.subr.mxu0 %v252
  %268 = vmatpush1.msra.mxu0 %v251
  %269 = vmatprep.subr.mxu0 %v255
  %270 = vmatpush1.msra.mxu0 %v254
  %271 = vmatprep.subr.mxu0 %v258
  %272 = vmatpush1.msra.mxu0 %v257
  %273 = vmatprep.subr.mxu0 %v261
  %274 = vmatpush1.msra.mxu0 %v260
  %275 = vmatprep.subr.mxu0 0.0
  %276 = vmatpush1.msra.mxu0 0.0
  %277 = vmatprep.subr.mxu0 0.0
  %278 = vmatpush1.msra.mxu0 0.0
  %279 = vmatprep.subr.mxu0 0.0
  %280 = vmatpush1.msra.mxu0 0.0
  %281 = vmatprep.subr.mxu0 0.0
  %282 = vmatpush1.msra.mxu0 0.0
  %283 = vmatprep.subr.mxu0 0.0
  %284 = vmatpush1.msra.mxu0 0.0
  %285 = vmatprep.subr.mxu0 0.0
  %286 = vmatpush1.msra.mxu0 0.0
  %287 = vmatprep.subr.mxu0 0.0
  %288 = vmatpush1.msra.mxu0 0.0
  %289 = vmatprep.subr.mxu0 0.0
  %290 = vmatpush1.msra.mxu0 0.0
  %291 = vmatprep.subr.mxu0 0.0
  %292 = vmatpush1.msra.mxu0 0.0
  %293 = vmatprep.subr.mxu0 0.0
  %294 = vmatpush1.msra.mxu0 0.0
  %295 = vmatprep.subr.mxu0 0.0
  %296 = vmatpush1.msra.mxu0 0.0
  %297 = vmatprep.subr.mxu0 0.0
  %298 = vmatpush1.msra.mxu0 0.0
  %299 = vmatprep.subr.mxu0 0.0
  %300 = vmatpush1.msra.mxu0 0.0
  %301 = vmatprep.subr.mxu0 0.0
  %302 = vmatpush1.msra.mxu0 0.0
  %303 = vmatprep.subr.mxu0 0.0
  %304 = vmatpush1.msra.mxu0 0.0
  %305 = vmatprep.subr.mxu0 0.0
  %306 = vmatpush1.msra.mxu0 0.0
  %307 = vmatprep.subr.mxu0 0.0
  %308 = vmatpush1.msra.mxu0 0.0
  %309 = vmatprep.subr.mxu0 0.0
  %310 = vmatpush1.msra.mxu0 0.0
  %311 = vmatprep.subr.mxu0 0.0
  %312 = vmatpush1.msra.mxu0 0.0
  %313 = vmatprep.subr.mxu0 0.0
  %314 = vmatpush1.msra.mxu0 0.0
  %315 = vmatprep.subr.mxu0 0.0
  %316 = vmatpush1.msra.mxu0 0.0
  %317 = vmatprep.subr.mxu0 0.0
  %318 = vmatpush1.msra.mxu0 0.0
  %319 = vmatprep.subr.mxu0 0.0
  %320 = vmatpush1.msra.mxu0 0.0
  %321 = vmatprep.subr.mxu0 0.0
  %322 = vmatpush1.msra.mxu0 0.0
  %323 = vmatprep.subr.mxu0 0.0
  %324 = vmatpush1.msra.mxu0 0.0
  %325 = vmatprep.subr.mxu0 0.0
  %326 = vmatpush1.msra.mxu0 0.0
  %327 = vmatprep.subr.mxu0 0.0
  %328 = vmatpush1.msra.mxu0 0.0
  %329 = vmatprep.subr.mxu0 0.0
  %330 = vmatpush1.msra.mxu0 0.0
  %331 = vmatprep.mubr.f32.mxu0 0.0
  %332 = vmatmul.mubr.f32.gmra.mrb[0].mxu0 %v265
  %v333 = vpop.f32.mrb[0].mxu0
  %v334 = vadd.f32 0.0, %v333
  %v335 = vpop.f32.mrb[0].mxu0
  %v336 = vadd.f32 0.0, %v335
  %337 = vdwg.mxu0
  %338 = vmatprep.subr.mxu0 0.0
  %339 = vmatpush1.msra.mxu0 %v253
  %340 = vmatprep.subr.mxu0 0.0
  %341 = vmatpush1.msra.mxu0 %v256
  %342 = vmatprep.subr.mxu0 0.0
  %343 = vmatpush1.msra.mxu0 %v259
  %344 = vmatprep.subr.mxu0 0.0
  %345 = vmatpush1.msra.mxu0 %v262
  %346 = vmatprep.subr.mxu0 0.0
  %347 = vmatpush1.msra.mxu0 0.0
  %348 = vmatprep.subr.mxu0 0.0
  %349 = vmatpush1.msra.mxu0 0.0
  %350 = vmatprep.subr.mxu0 0.0
  %351 = vmatpush1.msra.mxu0 0.0
  %352 = vmatprep.subr.mxu0 0.0
  %353 = vmatpush1.msra.mxu0 0.0
  %354 = vmatprep.subr.mxu0 0.0
  %355 = vmatpush1.msra.mxu0 0.0
  %356 = vmatprep.subr.mxu0 0.0
  %357 = vmatpush1.msra.mxu0 0.0
  %358 = vmatprep.subr.mxu0 0.0
  %359 = vmatpush1.msra.mxu0 0.0
  %360 = vmatprep.subr.mxu0 0.0
  %361 = vmatpush1.msra.mxu0 0.0
  %362 = vmatprep.subr.mxu0 0.0
  %363 = vmatpush1.msra.mxu0 0.0
  %364 = vmatprep.subr.mxu0 0.0
  %365 = vmatpush1.msra.mxu0 0.0
  %366 = vmatprep.subr.mxu0 0.0
  %367 = vmatpush1.msra.mxu0 0.0
  %368 = vmatprep.subr.mxu0 0.0
  %369 = vmatpush1.msra.mxu0 0.0
  %370 = vmatprep.subr.mxu0 0.0
  %371 = vmatpush1.msra.mxu0 0.0
  %372 = vmatprep.subr.mxu0 0.0
  %373 = vmatpush1.msra.mxu0 0.0
  %374 = vmatprep.subr.mxu0 0.0
  %375 = vmatpush1.msra.mxu0 0.0
  %376 = vmatprep.subr.mxu0 0.0
  %377 = vmatpush1.msra.mxu0 0.0
  %378 = vmatprep.subr.mxu0 0.0
  %379 = vmatpush1.msra.mxu0 0.0
  %380 = vmatprep.subr.mxu0 0.0
  %381 = vmatpush1.msra.mxu0 0.0
  %382 = vmatprep.subr.mxu0 0.0
  %383 = vmatpush1.msra.mxu0 0.0
  %384 = vmatprep.subr.mxu0 0.0
  %385 = vmatpush1.msra.mxu0 0.0
  %386 = vmatprep.subr.mxu0 0.0
  %387 = vmatpush1.msra.mxu0 0.0
  %388 = vmatprep.subr.mxu0 0.0
  %389 = vmatpush1.msra.mxu0 0.0
  %390 = vmatprep.subr.mxu0 0.0
  %391 = vmatpush1.msra.mxu0 0.0
  %392 = vmatprep.subr.mxu0 0.0
  %393 = vmatpush1.msra.mxu0 0.0
  %394 = vmatprep.subr.mxu0 0.0
  %395 = vmatpush1.msra.mxu0 0.0
  %396 = vmatprep.subr.mxu0 0.0
  %397 = vmatpush1.msra.mxu0 0.0
  %398 = vmatprep.subr.mxu0 0.0
  %399 = vmatpush1.msra.mxu0 0.0
  %400 = vmatprep.subr.mxu0 0.0
  %401 = vmatpush1.msra.mxu0 0.0
  %402 = vmatprep.mubr.f32.mxu0 0.0
  %403 = vmatmul.mubr.f32.gmra.mrb[0].mxu0 %v265
  %v404 = vpop.f32.mrb[0].mxu0
  %v405 = vadd.f32 0.0, %v404
  %v406 = vpop.f32.mrb[0].mxu0
  %407 = vdwg.mxu0
  %408 = vst [vmem:[%s19] sm:$0xff] %v249
  %v409 = vsub.f32 %v336, %v178
  %v410 = vsub.f32 %v405, %v247
  %v411 = vmul.f32 %v176, %v409
  %v412 = vmul.f32 %v334, %v409
  %413 = vmatprep.subr.mxu0 0.0
  %414 = vmatpush1.msra.mxu0 %v62
  %415 = vmatprep.subr.mxu0 0.0
  %416 = vmatpush1.msra.mxu0 %v63
  %417 = vmatprep.subr.mxu0 0.0
  %418 = vmatpush1.msra.mxu0 %v64
  %419 = vmatprep.subr.mxu0 0.0
  %420 = vmatpush1.msra.mxu0 %v65
  %421 = vmatprep.subr.mxu0 0.0
  %422 = vmatpush1.msra.mxu0 %v66
  %423 = vmatprep.subr.mxu0 0.0
  %424 = vmatpush1.msra.mxu0 %v67
  %425 = vmatprep.subr.mxu0 0.0
  %426 = vmatpush1.msra.mxu0 %v68
  %427 = vmatprep.subr.mxu0 0.0
  %428 = vmatpush1.msra.mxu0 %v69
  %429 = vmatprep.subr.mxu0 0.0
  %430 = vmatpush1.msra.mxu0 %v70
  %431 = vmatprep.subr.mxu0 0.0
  %432 = vmatpush1.msra.mxu0 %v71
  %433 = vmatprep.subr.mxu0 0.0
  %434 = vmatpush1.msra.mxu0 %v72
  %435 = vmatprep.subr.mxu0 0.0
  %436 = vmatpush1.msra.mxu0 %v73
  %437 = vmatprep.subr.mxu0 0.0
  %438 = vmatpush1.msra.mxu0 %v74
  %439 = vmatprep.subr.mxu0 0.0
  %440 = vmatpush1.msra.mxu0 %v75
  %441 = vmatprep.subr.mxu0 0.0
  %442 = vmatpush1.msra.mxu0 %v76
  %443 = vmatprep.subr.mxu0 0.0
  %444 = vmatpush1.msra.mxu0 %v77
  %445 = vmatprep.subr.mxu0 0.0
  %446 = vmatpush1.msra.mxu0 0.0
  %447 = vmatprep.subr.mxu0 0.0
  %448 = vmatpush1.msra.mxu0 0.0
  %449 = vmatprep.subr.mxu0 0.0
  %450 = vmatpush1.msra.mxu0 0.0
  %451 = vmatprep.subr.mxu0 0.0
  %452 = vmatpush1.msra.mxu0 0.0
  %453 = vmatprep.subr.mxu0 0.0
  %454 = vmatpush1.msra.mxu0 0.0
  %455 = vmatprep.subr.mxu0 0.0
  %456 = vmatpush1.msra.mxu0 0.0
  %457 = vmatprep.subr.mxu0 0.0
  %458 = vmatpush1.msra.mxu0 0.0
  %459 = vmatprep.subr.mxu0 0.0
  %460 = vmatpush1.msra.mxu0 0.0
  %461 = vmatprep.subr.mxu0 0.0
  %462 = vmatpush1.msra.mxu0 0.0
  %463 = vmatprep.subr.mxu0 0.0
  %464 = vmatpush1.msra.mxu0 0.0
  %465 = vmatprep.subr.mxu0 0.0
  %466 = vmatpush1.msra.mxu0 0.0
  %467 = vmatprep.subr.mxu0 0.0
  %468 = vmatpush1.msra.mxu0 0.0
  %469 = vmatprep.subr.mxu0 0.0
  %470 = vmatpush1.msra.mxu0 0.0
  %471 = vmatprep.subr.mxu0 0.0
  %472 = vmatpush1.msra.mxu0 0.0
  %473 = vmatprep.subr.mxu0 0.0
  %474 = vmatpush1.msra.mxu0 0.0
  %475 = vmatprep.subr.mxu0 0.0
  %476 = vmatpush1.msra.mxu0 0.0
  %477 = vmatprep.mubr.f32.mxu0 0.0
  %478 = vmatmul.mubr.f32.gmra.mrb[0].mxu0 %v411
  %v479 = vpop.f32.mrb[0].mxu0
  %v480 = vadd.f32 0.0, %v479
  %v481 = vpop.f32.mrb[0].mxu0
  %482 = vmatprep.mubr.f32.mxu0 0.0
  %483 = vmatmul.mubr.f32.gmra.mrb[0].mxu0 %v412
  %v484 = vpop.f32.mrb[0].mxu0
  %v485 = vadd.f32 0.0, %v484
  %v486 = vpop.f32.mrb[0].mxu0
  %487 = vdwg.mxu0
  %v488 = vmul.f32 %v480, 0.5
  %v489 = vmul.f32 %v485, 0.5
  %v490 = vtanh.pop %v488
  %v491 = vtanh.pop %v489
  %v492 = vmul.f32 %v490, 0.5
  %v493 = vmul.f32 %v491, 0.5
  %v494 = vadd.f32 %v492, 0.5
  %v495 = vadd.f32 %v493, 0.5
  %v496 = vmul.f32 %v494, %v410
  %v497 = vmul.f32 %v495, %v410
  %v498 = vadd.f32 %v247, %v496
  %v499 = vadd.f32 %v247, %v497
  %v500 = vld [vmem:[%s5] sm:$0xff]
  %v501 = vld [vmem:[%s5 + $0x8] sm:$0xff]
  %v502 = vld [vmem:[%s5 + $0x10] sm:$0xff]
  %v503 = vld [vmem:[%s5 + $0x18] sm:$0xff]
  %v504 = vld [vmem:[%s5 + $0x20] sm:$0xff]
  %v505 = vld [vmem:[%s5 + $0x28] sm:$0xff]
  %v506 = vld [vmem:[%s5 + $0x30] sm:$0xff]
  %v507 = vld [vmem:[%s5 + $0x38] sm:$0xff]
  %v508 = vld [vmem:[%s5 + $0x40] sm:$0xff]
  %v509 = vld [vmem:[%s5 + $0x48] sm:$0xff]
  %v510 = vld [vmem:[%s5 + $0x50] sm:$0xff]
  %v511 = vld [vmem:[%s5 + $0x58] sm:$0xff]
  %v512 = vld [vmem:[%s5 + $0x60] sm:$0xff]
  %v513 = vld [vmem:[%s5 + $0x68] sm:$0xff]
  %v514 = vld [vmem:[%s5 + $0x70] sm:$0xff]
  %v515 = vld [vmem:[%s5 + $0x78] sm:$0xff]
  %v516 = vld [vmem:[%s6] sm:$0x1]
  %v518 = vlaneseq
  %v519 = vshrl.u32 %v518, 7
  %v520 = vsub.s32 0, %v519
  %v521 = vrot.slane %v516, %v520
  %523 = vmatprep.subr.mxu0 0.0
  %524 = vmatpush1.msra.mxu0 %v500
  %525 = vmatprep.subr.mxu0 0.0
  %526 = vmatpush1.msra.mxu0 %v501
  %527 = vmatprep.subr.mxu0 0.0
  %528 = vmatpush1.msra.mxu0 %v502
  %529 = vmatprep.subr.mxu0 0.0
  %530 = vmatpush1.msra.mxu0 %v503
  %531 = vmatprep.subr.mxu0 0.0
  %532 = vmatpush1.msra.mxu0 %v504
  %533 = vmatprep.subr.mxu0 0.0
  %534 = vmatpush1.msra.mxu0 %v505
  %535 = vmatprep.subr.mxu0 0.0
  %536 = vmatpush1.msra.mxu0 %v506
  %537 = vmatprep.subr.mxu0 0.0
  %538 = vmatpush1.msra.mxu0 %v507
  %539 = vmatprep.subr.mxu0 0.0
  %540 = vmatpush1.msra.mxu0 %v508
  %541 = vmatprep.subr.mxu0 0.0
  %542 = vmatpush1.msra.mxu0 %v509
  %543 = vmatprep.subr.mxu0 0.0
  %544 = vmatpush1.msra.mxu0 %v510
  %545 = vmatprep.subr.mxu0 0.0
  %546 = vmatpush1.msra.mxu0 %v511
  %547 = vmatprep.subr.mxu0 0.0
  %548 = vmatpush1.msra.mxu0 %v512
  %549 = vmatprep.subr.mxu0 0.0
  %550 = vmatpush1.msra.mxu0 %v513
  %551 = vmatprep.subr.mxu0 0.0
  %552 = vmatpush1.msra.mxu0 %v514
  %553 = vmatprep.subr.mxu0 0.0
  %554 = vmatpush1.msra.mxu0 %v515
  %555 = vmatprep.subr.mxu0 0.0
  %556 = vmatpush1.msra.mxu0 0.0
  %557 = vmatprep.subr.mxu0 0.0
  %558 = vmatpush1.msra.mxu0 0.0
  %559 = vmatprep.subr.mxu0 0.0
  %560 = vmatpush1.msra.mxu0 0.0
  %561 = vmatprep.subr.mxu0 0.0
  %562 = vmatpush1.msra.mxu0 0.0
  %563 = vmatprep.subr.mxu0 0.0
  %564 = vmatpush1.msra.mxu0 0.0
  %565 = vmatprep.subr.mxu0 0.0
  %566 = vmatpush1.msra.mxu0 0.0
  %567 = vmatprep.subr.mxu0 0.0
  %568 = vmatpush1.msra.mxu0 0.0
  %569 = vmatprep.subr.mxu0 0.0
  %570 = vmatpush1.msra.mxu0 0.0
  %571 = vmatprep.subr.mxu0 0.0
  %572 = vmatpush1.msra.mxu0 0.0
  %573 = vmatprep.subr.mxu0 0.0
  %574 = vmatpush1.msra.mxu0 0.0
  %575 = vmatprep.subr.mxu0 0.0
  %576 = vmatpush1.msra.mxu0 0.0
  %577 = vmatprep.subr.mxu0 0.0
  %578 = vmatpush1.msra.mxu0 0.0
  %579 = vmatprep.subr.mxu0 0.0
  %580 = vmatpush1.msra.mxu0 0.0
  %581 = vmatprep.subr.mxu0 0.0
  %582 = vmatpush1.msra.mxu0 0.0
  %583 = vmatprep.subr.mxu0 0.0
  %584 = vmatpush1.msra.mxu0 0.0
  %585 = vmatprep.subr.mxu0 0.0
  %586 = vmatpush1.msra.mxu0 0.0
  %587 = vmatprep.mubr.f32.mxu0 0.0
  %588 = vmatmul.mubr.f32.gmra.mrb[0].mxu0 %v498
  %v589 = vpop.f32.mrb[0].mxu0
  %v590 = vadd.f32 %v521, %v589
  %v591 = vpop.f32.mrb[0].mxu0
  %592 = vmatprep.mubr.f32.mxu0 0.0
  %593 = vmatmul.mubr.f32.gmra.mrb[0].mxu0 %v499
  %v594 = vpop.f32.mrb[0].mxu0
  %v595 = vadd.f32 %v521, %v594
  %v596 = vpop.f32.mrb[0].mxu0
  %597 = vdwg.mxu0
  %v598 = vadd.f32 %v590, %v249
  %v599 = vadd.f32 %v595, %v61
  %v600 = vld [vmem:[%s7] sm:$0x1]
  %v601 = vld [vmem:[%s8] sm:$0x1]
  %v602 = vsel %vm263, %v598, 0.0
  %603 = vadd.xlane.f32.xlu0 %v602
  %v604 = vpop.xlane.xlu0 %603
  %v605 = vsel %vm263, %v599, 0.0
  %606 = vadd.xlane.f32.xlu0 %v605
  %v607 = vpop.xlane.xlu0 %606
  %v608 = vmul.f32 %v598, %v598
  %v609 = vmul.f32 %v599, %v599
  %v610 = vsel %vm263, %v608, 0.0
  %611 = vadd.xlane.f32.xlu0 %v610
  %v612 = vpop.xlane.xlu0 %611
  %v613 = vsel %vm263, %v609, 0.0
  %614 = vadd.xlane.f32.xlu0 %v613
  %v615 = vpop.xlane.xlu0 %614
  %v616 = vmul.f32 %v604, 0.03125
  %v617 = vmul.f32 %v607, 0.03125
  %v618 = vmul.f32 %v612, 0.03125
  %v619 = vmul.f32 %v615, 0.03125
  %v620 = vmul.f32 %v616, %v616
  %v621 = vmul.f32 %v617, %v617
  %v622 = vsub.f32 %v618, %v620
  %v623 = vsub.f32 %v619, %v621
  %v624 = vsub.f32 %v598, %v616
  %v625 = vsub.f32 %v599, %v617
  %v626 = vadd.f32 %v622, 1e-05
  %v627 = vadd.f32 %v623, 1e-05
  %v628 = vrsqrt.pop %v626
  %v629 = vrsqrt.pop %v627
  %v630 = vmul.f32 %v624, %v628
  %v631 = vmul.f32 %v625, %v629
  %v633 = vlaneseq
  %v634 = vshrl.u32 %v633, 7
  %v635 = vsub.s32 0, %v634
  %v636 = vrot.slane %v600, %v635
  %v638 = vmul.f32 %v630, %v636
  %v639 = vmul.f32 %v631, %v636
  %v641 = vlaneseq
  %v642 = vshrl.u32 %v641, 7
  %v643 = vsub.s32 0, %v642
  %v644 = vrot.slane %v601, %v643
  %v646 = vadd.f32 %v638, %v644
  %v647 = vadd.f32 %v639, %v644
  %v648 = vld [vmem:[%s9] sm:$0xff]
  %v649 = vld [vmem:[%s9 + $0x8] sm:$0xff]
  %v650 = vld [vmem:[%s9 + $0x10] sm:$0xff]
  %v651 = vld [vmem:[%s9 + $0x18] sm:$0xff]
  %v652 = vld [vmem:[%s10] sm:$0x1]
  %v654 = vlaneseq
  %v655 = vshrl.u32 %v654, 7
  %v656 = vsub.s32 0, %v655
  %v657 = vrot.slane %v652, %v656
  %v660 = vsel %vm263, %v646, 0
  %v663 = vsel %vm263, %v647, 0
  %665 = vmatprep.subr.mxu0 0.0
  %666 = vmatpush1.msra.mxu0 %v648
  %667 = vmatprep.subr.mxu0 0.0
  %668 = vmatpush1.msra.mxu0 %v649
  %669 = vmatprep.subr.mxu0 0.0
  %670 = vmatpush1.msra.mxu0 %v650
  %671 = vmatprep.subr.mxu0 0.0
  %672 = vmatpush1.msra.mxu0 %v651
  %673 = vmatprep.subr.mxu0 0.0
  %674 = vmatpush1.msra.mxu0 0.0
  %675 = vmatprep.subr.mxu0 0.0
  %676 = vmatpush1.msra.mxu0 0.0
  %677 = vmatprep.subr.mxu0 0.0
  %678 = vmatpush1.msra.mxu0 0.0
  %679 = vmatprep.subr.mxu0 0.0
  %680 = vmatpush1.msra.mxu0 0.0
  %681 = vmatprep.subr.mxu0 0.0
  %682 = vmatpush1.msra.mxu0 0.0
  %683 = vmatprep.subr.mxu0 0.0
  %684 = vmatpush1.msra.mxu0 0.0
  %685 = vmatprep.subr.mxu0 0.0
  %686 = vmatpush1.msra.mxu0 0.0
  %687 = vmatprep.subr.mxu0 0.0
  %688 = vmatpush1.msra.mxu0 0.0
  %689 = vmatprep.subr.mxu0 0.0
  %690 = vmatpush1.msra.mxu0 0.0
  %691 = vmatprep.subr.mxu0 0.0
  %692 = vmatpush1.msra.mxu0 0.0
  %693 = vmatprep.subr.mxu0 0.0
  %694 = vmatpush1.msra.mxu0 0.0
  %695 = vmatprep.subr.mxu0 0.0
  %696 = vmatpush1.msra.mxu0 0.0
  %697 = vmatprep.subr.mxu0 0.0
  %698 = vmatpush1.msra.mxu0 0.0
  %699 = vmatprep.subr.mxu0 0.0
  %700 = vmatpush1.msra.mxu0 0.0
  %701 = vmatprep.subr.mxu0 0.0
  %702 = vmatpush1.msra.mxu0 0.0
  %703 = vmatprep.subr.mxu0 0.0
  %704 = vmatpush1.msra.mxu0 0.0
  %705 = vmatprep.subr.mxu0 0.0
  %706 = vmatpush1.msra.mxu0 0.0
  %707 = vmatprep.subr.mxu0 0.0
  %708 = vmatpush1.msra.mxu0 0.0
  %709 = vmatprep.subr.mxu0 0.0
  %710 = vmatpush1.msra.mxu0 0.0
  %711 = vmatprep.subr.mxu0 0.0
  %712 = vmatpush1.msra.mxu0 0.0
  %713 = vmatprep.subr.mxu0 0.0
  %714 = vmatpush1.msra.mxu0 0.0
  %715 = vmatprep.subr.mxu0 0.0
  %716 = vmatpush1.msra.mxu0 0.0
  %717 = vmatprep.subr.mxu0 0.0
  %718 = vmatpush1.msra.mxu0 0.0
  %719 = vmatprep.subr.mxu0 0.0
  %720 = vmatpush1.msra.mxu0 0.0
  %721 = vmatprep.subr.mxu0 0.0
  %722 = vmatpush1.msra.mxu0 0.0
  %723 = vmatprep.subr.mxu0 0.0
  %724 = vmatpush1.msra.mxu0 0.0
  %725 = vmatprep.subr.mxu0 0.0
  %726 = vmatpush1.msra.mxu0 0.0
  %727 = vmatprep.subr.mxu0 0.0
  %728 = vmatpush1.msra.mxu0 0.0
  %729 = vmatprep.mubr.f32.mxu0 0.0
  %730 = vmatmul.mubr.f32.gmra.mrb[0].mxu0 %v660
  %v731 = vpop.f32.mrb[0].mxu0
  %v732 = vadd.f32 %v657, %v731
  %v733 = vpop.f32.mrb[0].mxu0
  %734 = vmatprep.mubr.f32.mxu0 0.0
  %735 = vmatmul.mubr.f32.gmra.mrb[0].mxu0 %v663
  %v736 = vpop.f32.mrb[0].mxu0
  %v737 = vadd.f32 %v657, %v736
  %v738 = vpop.f32.mrb[0].mxu0
  %739 = vdwg.mxu0
  %v740 = vmax.f32 %v732, 0.0
  %v741 = vmax.f32 %v737, 0.0
  %v742 = vld [vmem:[%s11] sm:$0xff]
  %v743 = vld [vmem:[%s11 + $0x8] sm:$0xff]
  %v744 = vld [vmem:[%s11 + $0x10] sm:$0xff]
  %v745 = vld [vmem:[%s11 + $0x18] sm:$0xff]
  %v746 = vld [vmem:[%s11 + $0x20] sm:$0xff]
  %v747 = vld [vmem:[%s11 + $0x28] sm:$0xff]
  %v748 = vld [vmem:[%s11 + $0x30] sm:$0xff]
  %v749 = vld [vmem:[%s11 + $0x38] sm:$0xff]
  %v750 = vld [vmem:[%s11 + $0x40] sm:$0xff]
  %v751 = vld [vmem:[%s11 + $0x48] sm:$0xff]
  %v752 = vld [vmem:[%s11 + $0x50] sm:$0xff]
  %v753 = vld [vmem:[%s11 + $0x58] sm:$0xff]
  %v754 = vld [vmem:[%s11 + $0x60] sm:$0xff]
  %v755 = vld [vmem:[%s11 + $0x68] sm:$0xff]
  %v756 = vld [vmem:[%s11 + $0x70] sm:$0xff]
  %v757 = vld [vmem:[%s11 + $0x78] sm:$0xff]
  %v758 = vld [vmem:[%s12] sm:$0x1]
  %v760 = vlaneseq
  %v761 = vshrl.u32 %v760, 7
  %v762 = vsub.s32 0, %v761
  %v763 = vrot.slane %v758, %v762
  %765 = vmatprep.subr.mxu0 0.0
  %766 = vmatpush1.msra.mxu0 %v742
  %767 = vmatprep.subr.mxu0 0.0
  %768 = vmatpush1.msra.mxu0 %v743
  %769 = vmatprep.subr.mxu0 0.0
  %770 = vmatpush1.msra.mxu0 %v744
  %771 = vmatprep.subr.mxu0 0.0
  %772 = vmatpush1.msra.mxu0 %v745
  %773 = vmatprep.subr.mxu0 0.0
  %774 = vmatpush1.msra.mxu0 %v746
  %775 = vmatprep.subr.mxu0 0.0
  %776 = vmatpush1.msra.mxu0 %v747
  %777 = vmatprep.subr.mxu0 0.0
  %778 = vmatpush1.msra.mxu0 %v748
  %779 = vmatprep.subr.mxu0 0.0
  %780 = vmatpush1.msra.mxu0 %v749
  %781 = vmatprep.subr.mxu0 0.0
  %782 = vmatpush1.msra.mxu0 %v750
  %783 = vmatprep.subr.mxu0 0.0
  %784 = vmatpush1.msra.mxu0 %v751
  %785 = vmatprep.subr.mxu0 0.0
  %786 = vmatpush1.msra.mxu0 %v752
  %787 = vmatprep.subr.mxu0 0.0
  %788 = vmatpush1.msra.mxu0 %v753
  %789 = vmatprep.subr.mxu0 0.0
  %790 = vmatpush1.msra.mxu0 %v754
  %791 = vmatprep.subr.mxu0 0.0
  %792 = vmatpush1.msra.mxu0 %v755
  %793 = vmatprep.subr.mxu0 0.0
  %794 = vmatpush1.msra.mxu0 %v756
  %795 = vmatprep.subr.mxu0 0.0
  %796 = vmatpush1.msra.mxu0 %v757
  %797 = vmatprep.subr.mxu0 0.0
  %798 = vmatpush1.msra.mxu0 0.0
  %799 = vmatprep.subr.mxu0 0.0
  %800 = vmatpush1.msra.mxu0 0.0
  %801 = vmatprep.subr.mxu0 0.0
  %802 = vmatpush1.msra.mxu0 0.0
  %803 = vmatprep.subr.mxu0 0.0
  %804 = vmatpush1.msra.mxu0 0.0
  %805 = vmatprep.subr.mxu0 0.0
  %806 = vmatpush1.msra.mxu0 0.0
  %807 = vmatprep.subr.mxu0 0.0
  %808 = vmatpush1.msra.mxu0 0.0
  %809 = vmatprep.subr.mxu0 0.0
  %810 = vmatpush1.msra.mxu0 0.0
  %811 = vmatprep.subr.mxu0 0.0
  %812 = vmatpush1.msra.mxu0 0.0
  %813 = vmatprep.subr.mxu0 0.0
  %814 = vmatpush1.msra.mxu0 0.0
  %815 = vmatprep.subr.mxu0 0.0
  %816 = vmatpush1.msra.mxu0 0.0
  %817 = vmatprep.subr.mxu0 0.0
  %818 = vmatpush1.msra.mxu0 0.0
  %819 = vmatprep.subr.mxu0 0.0
  %820 = vmatpush1.msra.mxu0 0.0
  %821 = vmatprep.subr.mxu0 0.0
  %822 = vmatpush1.msra.mxu0 0.0
  %823 = vmatprep.subr.mxu0 0.0
  %824 = vmatpush1.msra.mxu0 0.0
  %825 = vmatprep.subr.mxu0 0.0
  %826 = vmatpush1.msra.mxu0 0.0
  %827 = vmatprep.subr.mxu0 0.0
  %828 = vmatpush1.msra.mxu0 0.0
  %829 = vmatprep.mubr.f32.mxu0 0.0
  %830 = vmatmul.mubr.f32.gmra.mrb[0].mxu0 %v740
  %v831 = vpop.f32.mrb[0].mxu0
  %v832 = vadd.f32 %v763, %v831
  %v833 = vpop.f32.mrb[0].mxu0
  %834 = vmatprep.mubr.f32.mxu0 0.0
  %835 = vmatmul.mubr.f32.gmra.mrb[0].mxu0 %v741
  %v836 = vpop.f32.mrb[0].mxu0
  %v837 = vadd.f32 %v763, %v836
  %v838 = vpop.f32.mrb[0].mxu0
  %839 = vdwg.mxu0
  %v840 = vadd.f32 %v832, %v646
  %v841 = vadd.f32 %v837, %v647
  %v842 = vld [vmem:[%s13] sm:$0x1]
  %v843 = vld [vmem:[%s14] sm:$0x1]
  %v844 = vsel %vm263, %v840, 0.0
  %845 = vadd.xlane.f32.xlu0 %v844
  %v846 = vpop.xlane.xlu0 %845
  %v847 = vsel %vm263, %v841, 0.0
  %848 = vadd.xlane.f32.xlu0 %v847
  %v849 = vpop.xlane.xlu0 %848
  %v850 = vmul.f32 %v840, %v840
  %v851 = vmul.f32 %v841, %v841
  %v852 = vsel %vm263, %v850, 0.0
  %853 = vadd.xlane.f32.xlu0 %v852
  %v854 = vpop.xlane.xlu0 %853
  %v855 = vsel %vm263, %v851, 0.0
  %856 = vadd.xlane.f32.xlu0 %v855
  %v857 = vpop.xlane.xlu0 %856
  %v858 = vmul.f32 %v846, 0.03125
  %v859 = vmul.f32 %v849, 0.03125
  %v860 = vmul.f32 %v854, 0.03125
  %v861 = vmul.f32 %v857, 0.03125
  %v862 = vmul.f32 %v858, %v858
  %v863 = vmul.f32 %v859, %v859
  %v864 = vsub.f32 %v860, %v862
  %v865 = vsub.f32 %v861, %v863
  %v866 = vsub.f32 %v840, %v858
  %v867 = vsub.f32 %v841, %v859
  %v868 = vadd.f32 %v864, 1e-05
  %v869 = vadd.f32 %v865, 1e-05
  %v870 = vrsqrt.pop %v868
  %v871 = vrsqrt.pop %v869
  %v872 = vmul.f32 %v866, %v870
  %v873 = vmul.f32 %v867, %v871
  %v875 = vlaneseq
  %v876 = vshrl.u32 %v875, 7
  %v877 = vsub.s32 0, %v876
  %v878 = vrot.slane %v842, %v877
  %v880 = vmul.f32 %v872, %v878
  %v881 = vmul.f32 %v873, %v878
  %v883 = vlaneseq
  %v884 = vshrl.u32 %v883, 7
  %v885 = vsub.s32 0, %v884
  %v886 = vrot.slane %v843, %v885
  %v888 = vadd.f32 %v880, %v886
  %v889 = vadd.f32 %v881, %v886
  %s890 = scalar_lea.vmem %s4, 96
  %v891 = vld [vmem:[%s890] sm:$0xff]
  %v892 = vld [vmem:[%s890 + $0x8] sm:$0xff]
  %v893 = vld [vmem:[%s890 + $0x10] sm:$0xff]
  %v894 = vld [vmem:[%s890 + $0x18] sm:$0xff]
  %v895 = vld [vmem:[%s890 + $0x20] sm:$0xff]
  %v896 = vld [vmem:[%s890 + $0x28] sm:$0xff]
  %v897 = vld [vmem:[%s890 + $0x30] sm:$0xff]
  %v898 = vld [vmem:[%s890 + $0x38] sm:$0xff]
  %v899 = vld [vmem:[%s890 + $0x40] sm:$0xff]
  %v900 = vld [vmem:[%s890 + $0x48] sm:$0xff]
  %v901 = vld [vmem:[%s890 + $0x50] sm:$0xff]
  %v902 = vld [vmem:[%s890 + $0x58] sm:$0xff]
  %v904 = vsel %vm263, %v888, 0
  %v907 = vsel %vm263, %v889, 0
  %909 = vmatprep.subr.mxu0 %v892
  %910 = vmatpush1.msra.mxu0 %v891
  %911 = vmatprep.subr.mxu0 %v895
  %912 = vmatpush1.msra.mxu0 %v894
  %913 = vmatprep.subr.mxu0 %v898
  %914 = vmatpush1.msra.mxu0 %v897
  %915 = vmatprep.subr.mxu0 %v901
  %916 = vmatpush1.msra.mxu0 %v900
  %917 = vmatprep.subr.mxu0 0.0
  %918 = vmatpush1.msra.mxu0 0.0
  %919 = vmatprep.subr.mxu0 0.0
  %920 = vmatpush1.msra.mxu0 0.0
  %921 = vmatprep.subr.mxu0 0.0
  %922 = vmatpush1.msra.mxu0 0.0
  %923 = vmatprep.subr.mxu0 0.0
  %924 = vmatpush1.msra.mxu0 0.0
  %925 = vmatprep.subr.mxu0 0.0
  %926 = vmatpush1.msra.mxu0 0.0
  %927 = vmatprep.subr.mxu0 0.0
  %928 = vmatpush1.msra.mxu0 0.0
  %929 = vmatprep.subr.mxu0 0.0
  %930 = vmatpush1.msra.mxu0 0.0
  %931 = vmatprep.subr.mxu0 0.0
  %932 = vmatpush1.msra.mxu0 0.0
  %933 = vmatprep.subr.mxu0 0.0
  %934 = vmatpush1.msra.mxu0 0.0
  %935 = vmatprep.subr.mxu0 0.0
  %936 = vmatpush1.msra.mxu0 0.0
  %937 = vmatprep.subr.mxu0 0.0
  %938 = vmatpush1.msra.mxu0 0.0
  %939 = vmatprep.subr.mxu0 0.0
  %940 = vmatpush1.msra.mxu0 0.0
  %941 = vmatprep.subr.mxu0 0.0
  %942 = vmatpush1.msra.mxu0 0.0
  %943 = vmatprep.subr.mxu0 0.0
  %944 = vmatpush1.msra.mxu0 0.0
  %945 = vmatprep.subr.mxu0 0.0
  %946 = vmatpush1.msra.mxu0 0.0
  %947 = vmatprep.subr.mxu0 0.0
  %948 = vmatpush1.msra.mxu0 0.0
  %949 = vmatprep.subr.mxu0 0.0
  %950 = vmatpush1.msra.mxu0 0.0
  %951 = vmatprep.subr.mxu0 0.0
  %952 = vmatpush1.msra.mxu0 0.0
  %953 = vmatprep.subr.mxu0 0.0
  %954 = vmatpush1.msra.mxu0 0.0
  %955 = vmatprep.subr.mxu0 0.0
  %956 = vmatpush1.msra.mxu0 0.0
  %957 = vmatprep.subr.mxu0 0.0
  %958 = vmatpush1.msra.mxu0 0.0
  %959 = vmatprep.subr.mxu0 0.0
  %960 = vmatpush1.msra.mxu0 0.0
  %961 = vmatprep.subr.mxu0 0.0
  %962 = vmatpush1.msra.mxu0 0.0
  %963 = vmatprep.subr.mxu0 0.0
  %964 = vmatpush1.msra.mxu0 0.0
  %965 = vmatprep.subr.mxu0 0.0
  %966 = vmatpush1.msra.mxu0 0.0
  %967 = vmatprep.subr.mxu0 0.0
  %968 = vmatpush1.msra.mxu0 0.0
  %969 = vmatprep.subr.mxu0 0.0
  %970 = vmatpush1.msra.mxu0 0.0
  %971 = vmatprep.subr.mxu0 0.0
  %972 = vmatpush1.msra.mxu0 0.0
  %973 = vmatprep.mubr.f32.mxu0 0.0
  %974 = vmatmul.mubr.f32.gmra.mrb[0].mxu0 %v904
  %v975 = vpop.f32.mrb[0].mxu0
  %v976 = vadd.f32 0.0, %v975
  %v977 = vpop.f32.mrb[0].mxu0
  %v978 = vadd.f32 0.0, %v977
  %979 = vmatprep.mubr.f32.mxu0 0.0
  %980 = vmatmul.mubr.f32.gmra.mrb[0].mxu0 %v907
  %v981 = vpop.f32.mrb[0].mxu0
  %v982 = vadd.f32 0.0, %v981
  %v983 = vpop.f32.mrb[0].mxu0
  %v984 = vadd.f32 0.0, %v983
  %985 = vdwg.mxu0
  %986 = vmatprep.subr.mxu0 0.0
  %987 = vmatpush1.msra.mxu0 %v893
  %988 = vmatprep.subr.mxu0 0.0
  %989 = vmatpush1.msra.mxu0 %v896
  %990 = vmatprep.subr.mxu0 0.0
  %991 = vmatpush1.msra.mxu0 %v899
  %992 = vmatprep.subr.mxu0 0.0
  %993 = vmatpush1.msra.mxu0 %v902
  %994 = vmatprep.subr.mxu0 0.0
  %995 = vmatpush1.msra.mxu0 0.0
  %996 = vmatprep.subr.mxu0 0.0
  %997 = vmatpush1.msra.mxu0 0.0
  %998 = vmatprep.subr.mxu0 0.0
  %999 = vmatpush1.msra.mxu0 0.0
  %1000 = vmatprep.subr.mxu0 0.0
  %1001 = vmatpush1.msra.mxu0 0.0
  %1002 = vmatprep.subr.mxu0 0.0
  %1003 = vmatpush1.msra.mxu0 0.0
  %1004 = vmatprep.subr.mxu0 0.0
  %1005 = vmatpush1.msra.mxu0 0.0
  %1006 = vmatprep.subr.mxu0 0.0
  %1007 = vmatpush1.msra.mxu0 0.0
  %1008 = vmatprep.subr.mxu0 0.0
  %1009 = vmatpush1.msra.mxu0 0.0
  %1010 = vmatprep.subr.mxu0 0.0
  %1011 = vmatpush1.msra.mxu0 0.0
  %1012 = vmatprep.subr.mxu0 0.0
  %1013 = vmatpush1.msra.mxu0 0.0
  %1014 = vmatprep.subr.mxu0 0.0
  %1015 = vmatpush1.msra.mxu0 0.0
  %1016 = vmatprep.subr.mxu0 0.0
  %1017 = vmatpush1.msra.mxu0 0.0
  %1018 = vmatprep.subr.mxu0 0.0
  %1019 = vmatpush1.msra.mxu0 0.0
  %1020 = vmatprep.subr.mxu0 0.0
  %1021 = vmatpush1.msra.mxu0 0.0
  %1022 = vmatprep.subr.mxu0 0.0
  %1023 = vmatpush1.msra.mxu0 0.0
  %1024 = vmatprep.subr.mxu0 0.0
  %1025 = vmatpush1.msra.mxu0 0.0
  %1026 = vmatprep.subr.mxu0 0.0
  %1027 = vmatpush1.msra.mxu0 0.0
  %1028 = vmatprep.subr.mxu0 0.0
  %1029 = vmatpush1.msra.mxu0 0.0
  %1030 = vmatprep.subr.mxu0 0.0
  %1031 = vmatpush1.msra.mxu0 0.0
  %1032 = vmatprep.subr.mxu0 0.0
  %1033 = vmatpush1.msra.mxu0 0.0
  %1034 = vmatprep.subr.mxu0 0.0
  %1035 = vmatpush1.msra.mxu0 0.0
  %1036 = vmatprep.subr.mxu0 0.0
  %1037 = vmatpush1.msra.mxu0 0.0
  %1038 = vmatprep.subr.mxu0 0.0
  %1039 = vmatpush1.msra.mxu0 0.0
  %1040 = vmatprep.subr.mxu0 0.0
  %1041 = vmatpush1.msra.mxu0 0.0
  %1042 = vmatprep.subr.mxu0 0.0
  %1043 = vmatpush1.msra.mxu0 0.0
  %1044 = vmatprep.subr.mxu0 0.0
  %1045 = vmatpush1.msra.mxu0 0.0
  %1046 = vmatprep.subr.mxu0 0.0
  %1047 = vmatpush1.msra.mxu0 0.0
  %1048 = vmatprep.subr.mxu0 0.0
  %1049 = vmatpush1.msra.mxu0 0.0
  %1050 = vmatprep.mubr.f32.mxu0 0.0
  %1051 = vmatmul.mubr.f32.gmra.mrb[0].mxu0 %v904
  %v1052 = vpop.f32.mrb[0].mxu0
  %v1053 = vadd.f32 0.0, %v1052
  %v1054 = vpop.f32.mrb[0].mxu0
  %1055 = vmatprep.mubr.f32.mxu0 0.0
  %1056 = vmatmul.mubr.f32.gmra.mrb[0].mxu0 %v907
  %v1057 = vpop.f32.mrb[0].mxu0
  %v1058 = vadd.f32 0.0, %v1057
  %v1059 = vpop.f32.mrb[0].mxu0
  %1060 = vdwg.mxu0
  %v1061 = vsub.f32 %v984, %v978
  %v1062 = vsub.f32 %v1058, %v1053
  %v1063 = vmul.f32 %v976, %v1061
  %v1064 = vmul.f32 %v982, %v1061
  %1065 = vmatprep.subr.mxu0 0.0
  %1066 = vmatpush1.msra.mxu0 %v62
  %1067 = vmatprep.subr.mxu0 0.0
  %1068 = vmatpush1.msra.mxu0 %v63
  %1069 = vmatprep.subr.mxu0 0.0
  %1070 = vmatpush1.msra.mxu0 %v64
  %1071 = vmatprep.subr.mxu0 0.0
  %1072 = vmatpush1.msra.mxu0 %v65
  %1073 = vmatprep.subr.mxu0 0.0
  %1074 = vmatpush1.msra.mxu0 %v66
  %1075 = vmatprep.subr.mxu0 0.0
  %1076 = vmatpush1.msra.mxu0 %v67
  %1077 = vmatprep.subr.mxu0 0.0
  %1078 = vmatpush1.msra.mxu0 %v68
  %1079 = vmatprep.subr.mxu0 0.0
  %1080 = vmatpush1.msra.mxu0 %v69
  %1081 = vmatprep.subr.mxu0 0.0
  %1082 = vmatpush1.msra.mxu0 %v70
  %1083 = vmatprep.subr.mxu0 0.0
  %1084 = vmatpush1.msra.mxu0 %v71
  %1085 = vmatprep.subr.mxu0 0.0
  %1086 = vmatpush1.msra.mxu0 %v72
  %1087 = vmatprep.subr.mxu0 0.0
  %1088 = vmatpush1.msra.mxu0 %v73
  %1089 = vmatprep.subr.mxu0 0.0
  %1090 = vmatpush1.msra.mxu0 %v74
  %1091 = vmatprep.subr.mxu0 0.0
  %1092 = vmatpush1.msra.mxu0 %v75
  %1093 = vmatprep.subr.mxu0 0.0
  %1094 = vmatpush1.msra.mxu0 %v76
  %1095 = vmatprep.subr.mxu0 0.0
  %1096 = vmatpush1.msra.mxu0 %v77
  %1097 = vmatprep.subr.mxu0 0.0
  %1098 = vmatpush1.msra.mxu0 0.0
  %1099 = vmatprep.subr.mxu0 0.0
  %1100 = vmatpush1.msra.mxu0 0.0
  %1101 = vmatprep.subr.mxu0 0.0
  %1102 = vmatpush1.msra.mxu0 0.0
  %1103 = vmatprep.subr.mxu0 0.0
  %1104 = vmatpush1.msra.mxu0 0.0
  %1105 = vmatprep.subr.mxu0 0.0
  %1106 = vmatpush1.msra.mxu0 0.0
  %1107 = vmatprep.subr.mxu0 0.0
  %1108 = vmatpush1.msra.mxu0 0.0
  %1109 = vmatprep.subr.mxu0 0.0
  %1110 = vmatpush1.msra.mxu0 0.0
  %1111 = vmatprep.subr.mxu0 0.0
  %1112 = vmatpush1.msra.mxu0 0.0
  %1113 = vmatprep.subr.mxu0 0.0
  %1114 = vmatpush1.msra.mxu0 0.0
  %1115 = vmatprep.subr.mxu0 0.0
  %1116 = vmatpush1.msra.mxu0 0.0
  %1117 = vmatprep.subr.mxu0 0.0
  %1118 = vmatpush1.msra.mxu0 0.0
  %1119 = vmatprep.subr.mxu0 0.0
  %1120 = vmatpush1.msra.mxu0 0.0
  %1121 = vmatprep.subr.mxu0 0.0
  %1122 = vmatpush1.msra.mxu0 0.0
  %1123 = vmatprep.subr.mxu0 0.0
  %1124 = vmatpush1.msra.mxu0 0.0
  %1125 = vmatprep.subr.mxu0 0.0
  %1126 = vmatpush1.msra.mxu0 0.0
  %1127 = vmatprep.subr.mxu0 0.0
  %1128 = vmatpush1.msra.mxu0 0.0
  %1129 = vmatprep.mubr.f32.mxu0 0.0
  %1130 = vmatmul.mubr.f32.gmra.mrb[0].mxu0 %v1063
  %v1131 = vpop.f32.mrb[0].mxu0
  %v1132 = vadd.f32 0.0, %v1131
  %v1133 = vpop.f32.mrb[0].mxu0
  %1134 = vmatprep.mubr.f32.mxu0 0.0
  %1135 = vmatmul.mubr.f32.gmra.mrb[0].mxu0 %v1064
  %v1136 = vpop.f32.mrb[0].mxu0
  %v1137 = vadd.f32 0.0, %v1136
  %v1138 = vpop.f32.mrb[0].mxu0
  %1139 = vdwg.mxu0
  %v1140 = vmul.f32 %v1132, 0.5
  %v1141 = vmul.f32 %v1137, 0.5
  %v1142 = vtanh.pop %v1140
  %v1143 = vtanh.pop %v1141
  %v1144 = vmul.f32 %v1142, 0.5
  %v1145 = vmul.f32 %v1143, 0.5
  %v1146 = vadd.f32 %v1144, 0.5
  %v1147 = vadd.f32 %v1145, 0.5
  %v1148 = vmul.f32 %v1146, %v1062
  %v1149 = vmul.f32 %v1147, %v1062
  %v1150 = vadd.f32 %v1053, %v1148
  %v1151 = vadd.f32 %v1053, %v1149
  %s1152 = scalar_lea.vmem %s5, 128
  %v1153 = vld [vmem:[%s1152] sm:$0xff]
  %v1154 = vld [vmem:[%s1152 + $0x8] sm:$0xff]
  %v1155 = vld [vmem:[%s1152 + $0x10] sm:$0xff]
  %v1156 = vld [vmem:[%s1152 + $0x18] sm:$0xff]
  %v1157 = vld [vmem:[%s1152 + $0x20] sm:$0xff]
  %v1158 = vld [vmem:[%s1152 + $0x28] sm:$0xff]
  %v1159 = vld [vmem:[%s1152 + $0x30] sm:$0xff]
  %v1160 = vld [vmem:[%s1152 + $0x38] sm:$0xff]
  %v1161 = vld [vmem:[%s1152 + $0x40] sm:$0xff]
  %v1162 = vld [vmem:[%s1152 + $0x48] sm:$0xff]
  %v1163 = vld [vmem:[%s1152 + $0x50] sm:$0xff]
  %v1164 = vld [vmem:[%s1152 + $0x58] sm:$0xff]
  %v1165 = vld [vmem:[%s1152 + $0x60] sm:$0xff]
  %v1166 = vld [vmem:[%s1152 + $0x68] sm:$0xff]
  %v1167 = vld [vmem:[%s1152 + $0x70] sm:$0xff]
  %v1168 = vld [vmem:[%s1152 + $0x78] sm:$0xff]
  %s1169 = scalar_lea.vmem %s6, 1
  %v1170 = vld [vmem:[%s1169] sm:$0x1]
  %v1172 = vlaneseq
  %v1173 = vshrl.u32 %v1172, 7
  %v1174 = vsub.s32 0, %v1173
  %v1175 = vrot.slane %v1170, %v1174
  %1177 = vmatprep.subr.mxu0 0.0
  %1178 = vmatpush1.msra.mxu0 %v1153
  %1179 = vmatprep.subr.mxu0 0.0
  %1180 = vmatpush1.msra.mxu0 %v1154
  %1181 = vmatprep.subr.mxu0 0.0
  %1182 = vmatpush1.msra.mxu0 %v1155
  %1183 = vmatprep.subr.mxu0 0.0
  %1184 = vmatpush1.msra.mxu0 %v1156
  %1185 = vmatprep.subr.mxu0 0.0
  %1186 = vmatpush1.msra.mxu0 %v1157
  %1187 = vmatprep.subr.mxu0 0.0
  %1188 = vmatpush1.msra.mxu0 %v1158
  %1189 = vmatprep.subr.mxu0 0.0
  %1190 = vmatpush1.msra.mxu0 %v1159
  %1191 = vmatprep.subr.mxu0 0.0
  %1192 = vmatpush1.msra.mxu0 %v1160
  %1193 = vmatprep.subr.mxu0 0.0
  %1194 = vmatpush1.msra.mxu0 %v1161
  %1195 = vmatprep.subr.mxu0 0.0
  %1196 = vmatpush1.msra.mxu0 %v1162
  %1197 = vmatprep.subr.mxu0 0.0
  %1198 = vmatpush1.msra.mxu0 %v1163
  %1199 = vmatprep.subr.mxu0 0.0
  %1200 = vmatpush1.msra.mxu0 %v1164
  %1201 = vmatprep.subr.mxu0 0.0
  %1202 = vmatpush1.msra.mxu0 %v1165
  %1203 = vmatprep.subr.mxu0 0.0
  %1204 = vmatpush1.msra.mxu0 %v1166
  %1205 = vmatprep.subr.mxu0 0.0
  %1206 = vmatpush1.msra.mxu0 %v1167
  %1207 = vmatprep.subr.mxu0 0.0
  %1208 = vmatpush1.msra.mxu0 %v1168
  %1209 = vmatprep.subr.mxu0 0.0
  %1210 = vmatpush1.msra.mxu0 0.0
  %1211 = vmatprep.subr.mxu0 0.0
  %1212 = vmatpush1.msra.mxu0 0.0
  %1213 = vmatprep.subr.mxu0 0.0
  %1214 = vmatpush1.msra.mxu0 0.0
  %1215 = vmatprep.subr.mxu0 0.0
  %1216 = vmatpush1.msra.mxu0 0.0
  %1217 = vmatprep.subr.mxu0 0.0
  %1218 = vmatpush1.msra.mxu0 0.0
  %1219 = vmatprep.subr.mxu0 0.0
  %1220 = vmatpush1.msra.mxu0 0.0
  %1221 = vmatprep.subr.mxu0 0.0
  %1222 = vmatpush1.msra.mxu0 0.0
  %1223 = vmatprep.subr.mxu0 0.0
  %1224 = vmatpush1.msra.mxu0 0.0
  %1225 = vmatprep.subr.mxu0 0.0
  %1226 = vmatpush1.msra.mxu0 0.0
  %1227 = vmatprep.subr.mxu0 0.0
  %1228 = vmatpush1.msra.mxu0 0.0
  %1229 = vmatprep.subr.mxu0 0.0
  %1230 = vmatpush1.msra.mxu0 0.0
  %1231 = vmatprep.subr.mxu0 0.0
  %1232 = vmatpush1.msra.mxu0 0.0
  %1233 = vmatprep.subr.mxu0 0.0
  %1234 = vmatpush1.msra.mxu0 0.0
  %1235 = vmatprep.subr.mxu0 0.0
  %1236 = vmatpush1.msra.mxu0 0.0
  %1237 = vmatprep.subr.mxu0 0.0
  %1238 = vmatpush1.msra.mxu0 0.0
  %1239 = vmatprep.subr.mxu0 0.0
  %1240 = vmatpush1.msra.mxu0 0.0
  %1241 = vmatprep.mubr.f32.mxu0 0.0
  %1242 = vmatmul.mubr.f32.gmra.mrb[0].mxu0 %v1150
  %v1243 = vpop.f32.mrb[0].mxu0
  %v1244 = vadd.f32 %v1175, %v1243
  %v1245 = vpop.f32.mrb[0].mxu0
  %1246 = vmatprep.mubr.f32.mxu0 0.0
  %1247 = vmatmul.mubr.f32.gmra.mrb[0].mxu0 %v1151
  %v1248 = vpop.f32.mrb[0].mxu0
  %v1249 = vadd.f32 %v1175, %v1248
  %v1250 = vpop.f32.mrb[0].mxu0
  %1251 = vdwg.mxu0
  %v1252 = vadd.f32 %v1244, %v888
  %v1253 = vadd.f32 %v1249, %v889
  %s1254 = scalar_lea.vmem %s7, 1
  %v1255 = vld [vmem:[%s1254] sm:$0x1]
  %s1256 = scalar_lea.vmem %s8, 1
  %v1257 = vld [vmem:[%s1256] sm:$0x1]
  %v1258 = vsel %vm263, %v1252, 0.0
  %1259 = vadd.xlane.f32.xlu0 %v1258
  %v1260 = vpop.xlane.xlu0 %1259
  %v1261 = vsel %vm263, %v1253, 0.0
  %1262 = vadd.xlane.f32.xlu0 %v1261
  %v1263 = vpop.xlane.xlu0 %1262
  %v1264 = vmul.f32 %v1252, %v1252
  %v1265 = vmul.f32 %v1253, %v1253
  %v1266 = vsel %vm263, %v1264, 0.0
  %1267 = vadd.xlane.f32.xlu0 %v1266
  %v1268 = vpop.xlane.xlu0 %1267
  %v1269 = vsel %vm263, %v1265, 0.0
  %1270 = vadd.xlane.f32.xlu0 %v1269
  %v1271 = vpop.xlane.xlu0 %1270
  %v1272 = vmul.f32 %v1260, 0.03125
  %v1273 = vmul.f32 %v1263, 0.03125
  %v1274 = vmul.f32 %v1268, 0.03125
  %v1275 = vmul.f32 %v1271, 0.03125
  %v1276 = vmul.f32 %v1272, %v1272
  %v1277 = vmul.f32 %v1273, %v1273
  %v1278 = vsub.f32 %v1274, %v1276
  %v1279 = vsub.f32 %v1275, %v1277
  %v1280 = vsub.f32 %v1252, %v1272
  %v1281 = vsub.f32 %v1253, %v1273
  %v1282 = vadd.f32 %v1278, 1e-05
  %v1283 = vadd.f32 %v1279, 1e-05
  %v1284 = vrsqrt.pop %v1282
  %v1285 = vrsqrt.pop %v1283
  %v1286 = vmul.f32 %v1280, %v1284
  %v1287 = vmul.f32 %v1281, %v1285
  %v1289 = vlaneseq
  %v1290 = vshrl.u32 %v1289, 7
  %v1291 = vsub.s32 0, %v1290
  %v1292 = vrot.slane %v1255, %v1291
  %v1294 = vmul.f32 %v1286, %v1292
  %v1295 = vmul.f32 %v1287, %v1292
  %v1297 = vlaneseq
  %v1298 = vshrl.u32 %v1297, 7
  %v1299 = vsub.s32 0, %v1298
  %v1300 = vrot.slane %v1257, %v1299
  %v1302 = vadd.f32 %v1294, %v1300
  %v1303 = vadd.f32 %v1295, %v1300
  %s1304 = scalar_lea.vmem %s9, 32
  %v1305 = vld [vmem:[%s1304] sm:$0xff]
  %v1306 = vld [vmem:[%s1304 + $0x8] sm:$0xff]
  %v1307 = vld [vmem:[%s1304 + $0x10] sm:$0xff]
  %v1308 = vld [vmem:[%s1304 + $0x18] sm:$0xff]
  %s1309 = scalar_lea.vmem %s10, 1
  %v1310 = vld [vmem:[%s1309] sm:$0x1]
  %v1312 = vlaneseq
  %v1313 = vshrl.u32 %v1312, 7
  %v1314 = vsub.s32 0, %v1313
  %v1315 = vrot.slane %v1310, %v1314
  %v1318 = vsel %vm263, %v1302, 0
  %v1321 = vsel %vm263, %v1303, 0
  %1323 = vmatprep.subr.mxu0 0.0
  %1324 = vmatpush1.msra.mxu0 %v1305
  %1325 = vmatprep.subr.mxu0 0.0
  %1326 = vmatpush1.msra.mxu0 %v1306
  %1327 = vmatprep.subr.mxu0 0.0
  %1328 = vmatpush1.msra.mxu0 %v1307
  %1329 = vmatprep.subr.mxu0 0.0
  %1330 = vmatpush1.msra.mxu0 %v1308
  %1331 = vmatprep.subr.mxu0 0.0
  %1332 = vmatpush1.msra.mxu0 0.0
  %1333 = vmatprep.subr.mxu0 0.0
  %1334 = vmatpush1.msra.mxu0 0.0
  %1335 = vmatprep.subr.mxu0 0.0
  %1336 = vmatpush1.msra.mxu0 0.0
  %1337 = vmatprep.subr.mxu0 0.0
  %1338 = vmatpush1.msra.mxu0 0.0
  %1339 = vmatprep.subr.mxu0 0.0
  %1340 = vmatpush1.msra.mxu0 0.0
  %1341 = vmatprep.subr.mxu0 0.0
  %1342 = vmatpush1.msra.mxu0 0.0
  %1343 = vmatprep.subr.mxu0 0.0
  %1344 = vmatpush1.msra.mxu0 0.0
  %1345 = vmatprep.subr.mxu0 0.0
  %1346 = vmatpush1.msra.mxu0 0.0
  %1347 = vmatprep.subr.mxu0 0.0
  %1348 = vmatpush1.msra.mxu0 0.0
  %1349 = vmatprep.subr.mxu0 0.0
  %1350 = vmatpush1.msra.mxu0 0.0
  %1351 = vmatprep.subr.mxu0 0.0
  %1352 = vmatpush1.msra.mxu0 0.0
  %1353 = vmatprep.subr.mxu0 0.0
  %1354 = vmatpush1.msra.mxu0 0.0
  %1355 = vmatprep.subr.mxu0 0.0
  %1356 = vmatpush1.msra.mxu0 0.0
  %1357 = vmatprep.subr.mxu0 0.0
  %1358 = vmatpush1.msra.mxu0 0.0
  %1359 = vmatprep.subr.mxu0 0.0
  %1360 = vmatpush1.msra.mxu0 0.0
  %1361 = vmatprep.subr.mxu0 0.0
  %1362 = vmatpush1.msra.mxu0 0.0
  %1363 = vmatprep.subr.mxu0 0.0
  %1364 = vmatpush1.msra.mxu0 0.0
  %1365 = vmatprep.subr.mxu0 0.0
  %1366 = vmatpush1.msra.mxu0 0.0
  %1367 = vmatprep.subr.mxu0 0.0
  %1368 = vmatpush1.msra.mxu0 0.0
  %1369 = vmatprep.subr.mxu0 0.0
  %1370 = vmatpush1.msra.mxu0 0.0
  %1371 = vmatprep.subr.mxu0 0.0
  %1372 = vmatpush1.msra.mxu0 0.0
  %1373 = vmatprep.subr.mxu0 0.0
  %1374 = vmatpush1.msra.mxu0 0.0
  %1375 = vmatprep.subr.mxu0 0.0
  %1376 = vmatpush1.msra.mxu0 0.0
  %1377 = vmatprep.subr.mxu0 0.0
  %1378 = vmatpush1.msra.mxu0 0.0
  %1379 = vmatprep.subr.mxu0 0.0
  %1380 = vmatpush1.msra.mxu0 0.0
  %1381 = vmatprep.subr.mxu0 0.0
  %1382 = vmatpush1.msra.mxu0 0.0
  %1383 = vmatprep.subr.mxu0 0.0
  %1384 = vmatpush1.msra.mxu0 0.0
  %1385 = vmatprep.subr.mxu0 0.0
  %1386 = vmatpush1.msra.mxu0 0.0
  %1387 = vmatprep.mubr.f32.mxu0 0.0
  %1388 = vmatmul.mubr.f32.gmra.mrb[0].mxu0 %v1318
  %v1389 = vpop.f32.mrb[0].mxu0
  %v1390 = vadd.f32 %v1315, %v1389
  %v1391 = vpop.f32.mrb[0].mxu0
  %1392 = vmatprep.mubr.f32.mxu0 0.0
  %1393 = vmatmul.mubr.f32.gmra.mrb[0].mxu0 %v1321
  %v1394 = vpop.f32.mrb[0].mxu0
  %v1395 = vadd.f32 %v1315, %v1394
  %v1396 = vpop.f32.mrb[0].mxu0
  %1397 = vdwg.mxu0
  %v1398 = vmax.f32 %v1390, 0.0
  %v1399 = vmax.f32 %v1395, 0.0
  %s1400 = scalar_lea.vmem %s11, 128
  %v1401 = vld [vmem:[%s1400] sm:$0xff]
  %v1402 = vld [vmem:[%s1400 + $0x8] sm:$0xff]
  %v1403 = vld [vmem:[%s1400 + $0x10] sm:$0xff]
  %v1404 = vld [vmem:[%s1400 + $0x18] sm:$0xff]
  %v1405 = vld [vmem:[%s1400 + $0x20] sm:$0xff]
  %v1406 = vld [vmem:[%s1400 + $0x28] sm:$0xff]
  %v1407 = vld [vmem:[%s1400 + $0x30] sm:$0xff]
  %v1408 = vld [vmem:[%s1400 + $0x38] sm:$0xff]
  %v1409 = vld [vmem:[%s1400 + $0x40] sm:$0xff]
  %v1410 = vld [vmem:[%s1400 + $0x48] sm:$0xff]
  %v1411 = vld [vmem:[%s1400 + $0x50] sm:$0xff]
  %v1412 = vld [vmem:[%s1400 + $0x58] sm:$0xff]
  %v1413 = vld [vmem:[%s1400 + $0x60] sm:$0xff]
  %v1414 = vld [vmem:[%s1400 + $0x68] sm:$0xff]
  %v1415 = vld [vmem:[%s1400 + $0x70] sm:$0xff]
  %v1416 = vld [vmem:[%s1400 + $0x78] sm:$0xff]
  %s1417 = scalar_lea.vmem %s12, 1
  %v1418 = vld [vmem:[%s1417] sm:$0x1]
  %v1420 = vlaneseq
  %v1421 = vshrl.u32 %v1420, 7
  %v1422 = vsub.s32 0, %v1421
  %v1423 = vrot.slane %v1418, %v1422
  %1425 = vmatprep.subr.mxu0 0.0
  %1426 = vmatpush1.msra.mxu0 %v1401
  %1427 = vmatprep.subr.mxu0 0.0
  %1428 = vmatpush1.msra.mxu0 %v1402
  %1429 = vmatprep.subr.mxu0 0.0
  %1430 = vmatpush1.msra.mxu0 %v1403
  %1431 = vmatprep.subr.mxu0 0.0
  %1432 = vmatpush1.msra.mxu0 %v1404
  %1433 = vmatprep.subr.mxu0 0.0
  %1434 = vmatpush1.msra.mxu0 %v1405
  %1435 = vmatprep.subr.mxu0 0.0
  %1436 = vmatpush1.msra.mxu0 %v1406
  %1437 = vmatprep.subr.mxu0 0.0
  %1438 = vmatpush1.msra.mxu0 %v1407
  %1439 = vmatprep.subr.mxu0 0.0
  %1440 = vmatpush1.msra.mxu0 %v1408
  %1441 = vmatprep.subr.mxu0 0.0
  %1442 = vmatpush1.msra.mxu0 %v1409
  %1443 = vmatprep.subr.mxu0 0.0
  %1444 = vmatpush1.msra.mxu0 %v1410
  %1445 = vmatprep.subr.mxu0 0.0
  %1446 = vmatpush1.msra.mxu0 %v1411
  %1447 = vmatprep.subr.mxu0 0.0
  %1448 = vmatpush1.msra.mxu0 %v1412
  %1449 = vmatprep.subr.mxu0 0.0
  %1450 = vmatpush1.msra.mxu0 %v1413
  %1451 = vmatprep.subr.mxu0 0.0
  %1452 = vmatpush1.msra.mxu0 %v1414
  %1453 = vmatprep.subr.mxu0 0.0
  %1454 = vmatpush1.msra.mxu0 %v1415
  %1455 = vmatprep.subr.mxu0 0.0
  %1456 = vmatpush1.msra.mxu0 %v1416
  %1457 = vmatprep.subr.mxu0 0.0
  %1458 = vmatpush1.msra.mxu0 0.0
  %1459 = vmatprep.subr.mxu0 0.0
  %1460 = vmatpush1.msra.mxu0 0.0
  %1461 = vmatprep.subr.mxu0 0.0
  %1462 = vmatpush1.msra.mxu0 0.0
  %1463 = vmatprep.subr.mxu0 0.0
  %1464 = vmatpush1.msra.mxu0 0.0
  %1465 = vmatprep.subr.mxu0 0.0
  %1466 = vmatpush1.msra.mxu0 0.0
  %1467 = vmatprep.subr.mxu0 0.0
  %1468 = vmatpush1.msra.mxu0 0.0
  %1469 = vmatprep.subr.mxu0 0.0
  %1470 = vmatpush1.msra.mxu0 0.0
  %1471 = vmatprep.subr.mxu0 0.0
  %1472 = vmatpush1.msra.mxu0 0.0
  %1473 = vmatprep.subr.mxu0 0.0
  %1474 = vmatpush1.msra.mxu0 0.0
  %1475 = vmatprep.subr.mxu0 0.0
  %1476 = vmatpush1.msra.mxu0 0.0
  %1477 = vmatprep.subr.mxu0 0.0
  %1478 = vmatpush1.msra.mxu0 0.0
  %1479 = vmatprep.subr.mxu0 0.0
  %1480 = vmatpush1.msra.mxu0 0.0
  %1481 = vmatprep.subr.mxu0 0.0
  %1482 = vmatpush1.msra.mxu0 0.0
  %1483 = vmatprep.subr.mxu0 0.0
  %1484 = vmatpush1.msra.mxu0 0.0
  %1485 = vmatprep.subr.mxu0 0.0
  %1486 = vmatpush1.msra.mxu0 0.0
  %1487 = vmatprep.subr.mxu0 0.0
  %1488 = vmatpush1.msra.mxu0 0.0
  %1489 = vmatprep.mubr.f32.mxu0 0.0
  %1490 = vmatmul.mubr.f32.gmra.mrb[0].mxu0 %v1398
  %v1491 = vpop.f32.mrb[0].mxu0
  %v1492 = vadd.f32 %v1423, %v1491
  %v1493 = vpop.f32.mrb[0].mxu0
  %1494 = vmatprep.mubr.f32.mxu0 0.0
  %1495 = vmatmul.mubr.f32.gmra.mrb[0].mxu0 %v1399
  %v1496 = vpop.f32.mrb[0].mxu0
  %v1497 = vadd.f32 %v1423, %v1496
  %v1498 = vpop.f32.mrb[0].mxu0
  %1499 = vdwg.mxu0
  %v1500 = vadd.f32 %v1492, %v1302
  %v1501 = vadd.f32 %v1497, %v1303
  %s1502 = scalar_lea.vmem %s13, 1
  %v1503 = vld [vmem:[%s1502] sm:$0x1]
  %s1504 = scalar_lea.vmem %s14, 1
  %v1505 = vld [vmem:[%s1504] sm:$0x1]
  %v1506 = vsel %vm263, %v1500, 0.0
  %1507 = vadd.xlane.f32.xlu0 %v1506
  %v1508 = vpop.xlane.xlu0 %1507
  %v1509 = vsel %vm263, %v1501, 0.0
  %1510 = vadd.xlane.f32.xlu0 %v1509
  %v1511 = vpop.xlane.xlu0 %1510
  %v1512 = vmul.f32 %v1500, %v1500
  %v1513 = vmul.f32 %v1501, %v1501
  %v1514 = vsel %vm263, %v1512, 0.0
  %1515 = vadd.xlane.f32.xlu0 %v1514
  %v1516 = vpop.xlane.xlu0 %1515
  %v1517 = vsel %vm263, %v1513, 0.0
  %1518 = vadd.xlane.f32.xlu0 %v1517
  %v1519 = vpop.xlane.xlu0 %1518
  %v1520 = vmul.f32 %v1508, 0.03125
  %v1521 = vmul.f32 %v1511, 0.03125
  %v1522 = vmul.f32 %v1516, 0.03125
  %v1523 = vmul.f32 %v1519, 0.03125
  %v1524 = vmul.f32 %v1520, %v1520
  %v1525 = vmul.f32 %v1521, %v1521
  %v1526 = vsub.f32 %v1522, %v1524
  %v1527 = vsub.f32 %v1523, %v1525
  %v1528 = vsub.f32 %v1500, %v1520
  %v1529 = vsub.f32 %v1501, %v1521
  %v1530 = vadd.f32 %v1526, 1e-05
  %v1531 = vadd.f32 %v1527, 1e-05
  %v1532 = vrsqrt.pop %v1530
  %v1533 = vrsqrt.pop %v1531
  %v1534 = vmul.f32 %v1528, %v1532
  %v1535 = vmul.f32 %v1529, %v1533
  %v1537 = vlaneseq
  %v1538 = vshrl.u32 %v1537, 7
  %v1539 = vsub.s32 0, %v1538
  %v1540 = vrot.slane %v1503, %v1539
  %v1542 = vmul.f32 %v1534, %v1540
  %v1543 = vmul.f32 %v1535, %v1540
  %v1545 = vlaneseq
  %v1546 = vshrl.u32 %v1545, 7
  %v1547 = vsub.s32 0, %v1546
  %v1548 = vrot.slane %v1505, %v1547
  %v1550 = vadd.f32 %v1542, %v1548
  %v1551 = vadd.f32 %v1543, %v1548
  %v1552 = vld [vmem:[%s16] sm:$0xff]
  %v1553 = vld [vmem:[%s16 + $0x8] sm:$0xff]
  %v1554 = vld [vmem:[%s16 + $0x10] sm:$0xff]
  %v1555 = vld [vmem:[%s16 + $0x18] sm:$0xff]
  %v1556 = vld [vmem:[%s17] sm:$0x1]
  %v1558 = vlaneseq
  %v1559 = vshrl.u32 %v1558, 7
  %v1560 = vsub.s32 0, %v1559
  %v1561 = vrot.slane %v1556, %v1560
  %v1564 = vsel %vm263, %v1550, 0
  %v1567 = vsel %vm263, %v1551, 0
  %1569 = vmatprep.subr.mxu0 0.0
  %1570 = vmatpush1.msra.mxu0 %v1552
  %1571 = vmatprep.subr.mxu0 0.0
  %1572 = vmatpush1.msra.mxu0 %v1553
  %1573 = vmatprep.subr.mxu0 0.0
  %1574 = vmatpush1.msra.mxu0 %v1554
  %1575 = vmatprep.subr.mxu0 0.0
  %1576 = vmatpush1.msra.mxu0 %v1555
  %1577 = vmatprep.subr.mxu0 0.0
  %1578 = vmatpush1.msra.mxu0 0.0
  %1579 = vmatprep.subr.mxu0 0.0
  %1580 = vmatpush1.msra.mxu0 0.0
  %1581 = vmatprep.subr.mxu0 0.0
  %1582 = vmatpush1.msra.mxu0 0.0
  %1583 = vmatprep.subr.mxu0 0.0
  %1584 = vmatpush1.msra.mxu0 0.0
  %1585 = vmatprep.subr.mxu0 0.0
  %1586 = vmatpush1.msra.mxu0 0.0
  %1587 = vmatprep.subr.mxu0 0.0
  %1588 = vmatpush1.msra.mxu0 0.0
  %1589 = vmatprep.subr.mxu0 0.0
  %1590 = vmatpush1.msra.mxu0 0.0
  %1591 = vmatprep.subr.mxu0 0.0
  %1592 = vmatpush1.msra.mxu0 0.0
  %1593 = vmatprep.subr.mxu0 0.0
  %1594 = vmatpush1.msra.mxu0 0.0
  %1595 = vmatprep.subr.mxu0 0.0
  %1596 = vmatpush1.msra.mxu0 0.0
  %1597 = vmatprep.subr.mxu0 0.0
  %1598 = vmatpush1.msra.mxu0 0.0
  %1599 = vmatprep.subr.mxu0 0.0
  %1600 = vmatpush1.msra.mxu0 0.0
  %1601 = vmatprep.subr.mxu0 0.0
  %1602 = vmatpush1.msra.mxu0 0.0
  %1603 = vmatprep.subr.mxu0 0.0
  %1604 = vmatpush1.msra.mxu0 0.0
  %1605 = vmatprep.subr.mxu0 0.0
  %1606 = vmatpush1.msra.mxu0 0.0
  %1607 = vmatprep.subr.mxu0 0.0
  %1608 = vmatpush1.msra.mxu0 0.0
  %1609 = vmatprep.subr.mxu0 0.0
  %1610 = vmatpush1.msra.mxu0 0.0
  %1611 = vmatprep.subr.mxu0 0.0
  %1612 = vmatpush1.msra.mxu0 0.0
  %1613 = vmatprep.subr.mxu0 0.0
  %1614 = vmatpush1.msra.mxu0 0.0
  %1615 = vmatprep.subr.mxu0 0.0
  %1616 = vmatpush1.msra.mxu0 0.0
  %1617 = vmatprep.subr.mxu0 0.0
  %1618 = vmatpush1.msra.mxu0 0.0
  %1619 = vmatprep.subr.mxu0 0.0
  %1620 = vmatpush1.msra.mxu0 0.0
  %1621 = vmatprep.subr.mxu0 0.0
  %1622 = vmatpush1.msra.mxu0 0.0
  %1623 = vmatprep.subr.mxu0 0.0
  %1624 = vmatpush1.msra.mxu0 0.0
  %1625 = vmatprep.subr.mxu0 0.0
  %1626 = vmatpush1.msra.mxu0 0.0
  %1627 = vmatprep.subr.mxu0 0.0
  %1628 = vmatpush1.msra.mxu0 0.0
  %1629 = vmatprep.subr.mxu0 0.0
  %1630 = vmatpush1.msra.mxu0 0.0
  %1631 = vmatprep.subr.mxu0 0.0
  %1632 = vmatpush1.msra.mxu0 0.0
  %1633 = vmatprep.mubr.f32.mxu0 0.0
  %1634 = vmatmul.mubr.f32.gmra.mrb[0].mxu0 %v1564
  %v1635 = vpop.f32.mrb[0].mxu0
  %v1636 = vadd.f32 %v1561, %v1635
  %v1637 = vpop.f32.mrb[0].mxu0
  %1638 = vmatprep.mubr.f32.mxu0 0.0
  %1639 = vmatmul.mubr.f32.gmra.mrb[0].mxu0 %v1567
  %v1640 = vpop.f32.mrb[0].mxu0
  %v1641 = vadd.f32 %v1561, %v1640
  %v1642 = vpop.f32.mrb[0].mxu0
  %1643 = vdwg.mxu0
  %1644 = vst [vmem:[%s18] sm:$0xff] %v1636
  %1645 = vst [vmem:[%s18 + $0x8] sm:$0xff] %v1641
  // Predicated region
  $region74: #{transformer_forward.1} parent=0 // pred_check
    _
  $region75: #{transformer_forward.1} parent=0 // pred_check_branch
    %1647 = sbr.rel (0) target = $region77
  $region76: #{transformer_forward.1} parent=0 // pred_region
    _
  $region77: #{transformer_forward.1} parent=0 // pred_fallthru
    _
  // Predicated region
  $region78: #{transformer_forward.1} parent=0 // pred_check
    _
  $region79: #{transformer_forward.1} parent=0 // pred_check_branch
    %1649 = sbr.rel (0) target = $region81
  $region80: #{transformer_forward.1} parent=0 // pred_region
    _
  $region81: #{transformer_forward.1} parent=0 // pred_fallthru
    _
  // Predicated region
  $region82: #{transformer_forward.1} parent=0 // pred_check
    _
  $region83: #{transformer_forward.1} parent=0 // pred_check_branch
    %1651 = sbr.rel (0) target = $region85
  $region84: #{transformer_forward.1} parent=0 // pred_region
    _
  $region85: #{transformer_forward.1} parent=0 // pred_fallthru
    _
  // Predicated region
  $region86: #{transformer_forward.1} parent=0 // pred_check
    _
  $region87: #{transformer_forward.1} parent=0 // pred_check_branch
    %1653 = sbr.rel (0) target = $region89
  $region88: #{transformer_forward.1} parent=0 // pred_region
    _
  $region89: #{transformer_forward.1} parent=0 // pred_fallthru
    _

</llo_original>
